<compile_context>
chip_gen: v5e
topology: v5e:2x2
jax: 0.10.0
libtpu: 0.0.40
codegen_flags: <defaults>
</compile_context>

<pallas_src>
import functools
import math

import numpy as np
import jax
import jax.numpy as jnp
from jax.experimental import pallas as pl
from jax.experimental.pallas import tpu as pltpu


# ---------------------------------------------------------------------------
# Generation-aware VMEM budget / tiling helpers
# ---------------------------------------------------------------------------

def _vmem_capacity_bytes():
    try:
        info = pltpu.get_tpu_info()
        cap = getattr(info, "vmem_capacity_bytes", None)
        if cap:
            return int(cap)
    except Exception:
        pass
    return 64 * 1024 * 1024                       # conservative default (v7x per-TC)


# v7x (64 MiB/TC) -> 48 MiB scoped limit; v5e/v6e (128 MiB) -> 96 MiB scoped limit.
_VMEM_LIMIT = min(int(_vmem_capacity_bytes() * 3 // 4), 100 * 1024 * 1024)


def _cparams(n_grid_axes=0):
    kwargs = dict(vmem_limit_bytes=_VMEM_LIMIT)
    if n_grid_axes:
        kwargs["dimension_semantics"] = ("parallel",) * n_grid_axes
    return pltpu.CompilerParams(**kwargs)


def _row_tile(M, row_bytes, *, budget, pref=512):
    """Largest multiple-of-8 row tile that divides M and fits `budget`; if the whole
    array fits in one tile we still split in two so the 'parallel' grid axis has
    >=2 steps (v7x megacore)."""
    cap = max(8, min(pref, budget // max(row_bytes, 1)))
    cap = (cap // 8) * 8
    best = None
    t = 8
    while t <= min(M, cap):
        if M % t == 0:
            best = t
        t += 8
    if best is None:
        # TODO(synk): pad M to a multiple of 8 upstream for awkward shapes; here M = B*Sp
        # is already sublane-aligned because Sp is padded to a multiple of 8.
        return M
    if best == M and M >= 16 and (M // 2) % 8 == 0:
        best = M // 2
    return best


def _const_spec(block_shape, index_map):
    """BlockSpec for an index-invariant operand (weights / biases / PE): single-buffered."""
    try:
        return pl.BlockSpec(block_shape, index_map, pipeline_mode=pl.Buffered(1))
    except TypeError:                              # older jax without pipeline_mode kwarg
        return pl.BlockSpec(block_shape, index_map)


# ---------------------------------------------------------------------------
# Pallas kernels
# ---------------------------------------------------------------------------

def _patch_embed_kernel(x_ref, w_ref, b_ref, pe_ref, o_ref):
    """(N, C*p*p) @ (C*p*p, E) + bias + positional encoding (fused epilogue)."""
    y = jnp.dot(x_ref[...].astype(w_ref.dtype), w_ref[...],
                preferred_element_type=jnp.float32)
    o_ref[...] = y + b_ref[...] + pe_ref[...]


def patch_embed(patches, w, b, pe, B, N):
    """patches: (B*N, C*p*p) f32, w: (C*p*p, E) bf16, pe: (N, E) f32 -> (B*N, E) f32."""
    Cpp = patches.shape[1]
    E = w.shape[1]
    return pl.pallas_call(
        _patch_embed_kernel,
        out_shape=jax.ShapeDtypeStruct((B * N, E), jnp.float32),
        grid=(B,),
        in_specs=[
            pl.BlockSpec((N, Cpp), lambda i: (i, 0)),
            _const_spec((Cpp, E), lambda i: (0, 0)),
            _const_spec((1, E), lambda i: (0, 0)),
            _const_spec((N, E), lambda i: (0, 0)),
        ],
        out_specs=pl.BlockSpec((N, E), lambda i: (i, 0)),
        compiler_params=_cparams(1),
    )(patches, w, b.reshape(1, E), pe)


def _attn_block_kernel(x_ref, g1_ref, b1_ref, wqkv_ref, bqkv_ref, wo_ref, bo_ref,
                       o_ref, qkv_sc, attn_sc, *, num_heads, head_dim, s_valid,
                       scale, eps):
    """One grid step = one batch item.  Fused: LN1 -> QKV -> MHA -> WO + bias + residual."""
    x = x_ref[0]                                            # (Sp, E) f32 residual stream
    # LayerNorm 1 (f32)
    mu = jnp.mean(x, axis=-1, keepdims=True)
    var = jnp.mean(jnp.square(x - mu), axis=-1, keepdims=True)
    xn = (x - mu) * jax.lax.rsqrt(var + eps) * g1_ref[...] + b1_ref[...]
    # Fused QKV projection (single (E, 3E) matmul) -> bf16 VMEM scratch
    qkv = jnp.dot(xn.astype(wqkv_ref.dtype), wqkv_ref[...],
                  preferred_element_type=jnp.float32) + bqkv_ref[...]
    qkv_sc[...] = qkv.astype(qkv_sc.dtype)

    E = num_heads * head_dim
    Sp = x.shape[0]
    # Mask for padded key columns (tokens >= s_valid never contribute to softmax).
    col = jax.lax.broadcasted_iota(jnp.int32, (Sp, Sp), 1)
    key_mask = jnp.where(col < s_valid, 0.0, -1e30).astype(jnp.float32)

    # TODO(synk): full Sp x Sp score tile per head lives in VMEM; use an online-softmax
    # (flash) formulation for long sequences.
    for h in range(num_heads):
        q = qkv_sc[:, h * head_dim:(h + 1) * head_dim]                      # (Sp, Dh) bf16
        k = qkv_sc[:, E + h * head_dim:E + (h + 1) * head_dim]
        v = qkv_sc[:, 2 * E + h * head_dim:2 * E + (h + 1) * head_dim]
        # Contract last dims directly on the MXU -- no in-kernel transpose.
        s = jax.lax.dot_general(q, k, (((1,), (1,)), ((), ())),
                                preferred_element_type=jnp.float32) * scale
        s = s + key_mask
        s = s - jnp.max(s, axis=-1, keepdims=True)
        p = jnp.exp(s)
        p = p * pl.reciprocal(jnp.sum(p, axis=-1, keepdims=True), approx=True)
        o = jnp.dot(p.astype(v.dtype), v, preferred_element_type=jnp.float32)
        attn_sc[:, h * head_dim:(h + 1) * head_dim] = o.astype(attn_sc.dtype)

    # Output projection + bias + residual (fused epilogue); single lane-dense store.
    y = jnp.dot(attn_sc[...], wo_ref[...], preferred_element_type=jnp.float32)
    o_ref[0] = y + bo_ref[...] + x


def attention_block(x, g1, b1, wqkv, bqkv, wo, bo, *, num_heads, head_dim, s_valid,
                    eps=1e-5):
    """x: (B, Sp, E) f32 -> x + MHA(LN1(x)) in a single pallas_call."""
    B, Sp, E = x.shape
    kernel = functools.partial(
        _attn_block_kernel, num_heads=num_heads, head_dim=head_dim,
        s_valid=s_valid, scale=1.0 / math.sqrt(head_dim), eps=eps)
    return pl.pallas_call(
        kernel,
        out_shape=jax.ShapeDtypeStruct((B, Sp, E), jnp.float32),
        grid=(B,),
        in_specs=[
            pl.BlockSpec((1, Sp, E), lambda b: (b, 0, 0)),
            _const_spec((1, E), lambda b: (0, 0)),
            _const_spec((1, E), lambda b: (0, 0)),
            _const_spec((E, 3 * E), lambda b: (0, 0)),
            _const_spec((1, 3 * E), lambda b: (0, 0)),
            _const_spec((E, E), lambda b: (0, 0)),
            _const_spec((1, E), lambda b: (0, 0)),
        ],
        out_specs=pl.BlockSpec((1, Sp, E), lambda b: (b, 0, 0)),
        scratch_shapes=[pltpu.VMEM((Sp, 3 * E), jnp.bfloat16),
                        pltpu.VMEM((Sp, E), jnp.bfloat16)],
        compiler_params=_cparams(1),
    )(x, g1.reshape(1, E), b1.reshape(1, E), wqkv, bqkv.reshape(1, 3 * E),
      wo, bo.reshape(1, E))


def _mlp_block_kernel(x_ref, g2_ref, b2_ref, w1_ref, bias1_ref, w2_ref, bias2_ref,
                      o_ref, *, eps):
    """Fused: LN2 -> MLP1 (ReLU) -> MLP2 + bias + residual.  f32 LN/acc, bf16 MXU inputs."""
    x = x_ref[...]                                          # (tm, E) f32
    mu = jnp.mean(x, axis=-1, keepdims=True)
    var = jnp.mean(jnp.square(x - mu), axis=-1, keepdims=True)
    xn = (x - mu) * jax.lax.rsqrt(var + eps) * g2_ref[...] + b2_ref[...]
    h = jnp.dot(xn.astype(w1_ref.dtype), w1_ref[...],
                preferred_element_type=jnp.float32) + bias1_ref[...]
    h = jnp.maximum(h, 0.0)                                 # ReLU
    y = jnp.dot(h.astype(w2_ref.dtype), w2_ref[...],
                preferred_element_type=jnp.float32) + bias2_ref[...]
    o_ref[...] = y + x                                      # residual epilogue


def mlp_block(x, g2, b2, w1, bias1, w2, bias2, *, eps=1e-5):
    """x: (M, E) f32 -> x + MLP(LN2(x)) in a single pallas_call, row-tiled grid."""
    M, E = x.shape
    Hh = w1.shape[1]
    weight_bytes = 2 * (E * Hh + Hh * E) + 4 * (Hh + 3 * E)          # bf16 weights, f32 biases
    row_bytes = 4 * (2 * E + 2 * E + 2 * Hh)                         # in x2 + out x2 + hidden
    tm = _row_tile(M, row_bytes, budget=_VMEM_LIMIT - weight_bytes)
    kernel = functools.partial(_mlp_block_kernel, eps=eps)
    return pl.pallas_call(
        kernel,
        out_shape=jax.ShapeDtypeStruct((M, E), jnp.float32),
        grid=(M // tm,),
        in_specs=[
            pl.BlockSpec((tm, E), lambda i: (i, 0)),
            _const_spec((1, E), lambda i: (0, 0)),
            _const_spec((1, E), lambda i: (0, 0)),
            _const_spec((E, Hh), lambda i: (0, 0)),
            _const_spec((1, Hh), lambda i: (0, 0)),
            _const_spec((Hh, E), lambda i: (0, 0)),
            _const_spec((1, E), lambda i: (0, 0)),
        ],
        out_specs=pl.BlockSpec((tm, E), lambda i: (i, 0)),
        compiler_params=_cparams(1),
    )(x, g2.reshape(1, E), b2.reshape(1, E), w1, bias1.reshape(1, Hh),
      w2, bias2.reshape(1, E))


def _classifier_softmax_kernel(x_ref, w_ref, b_ref, o_ref):
    logits = jnp.dot(x_ref[...].astype(w_ref.dtype), w_ref[...],
                     preferred_element_type=jnp.float32) + b_ref[...]
    m = jnp.max(logits, axis=-1, keepdims=True)
    e = jnp.exp(logits - m)
    # Exact normalization on the user-visible probabilities (no approx reciprocal here).
    o_ref[...] = e / jnp.sum(e, axis=-1, keepdims=True)


def classifier_softmax(x, w, b):
    """Fused nn.Linear + F.softmax on the CLS token."""
    M, K = x.shape
    N = w.shape[1]
    # TODO(synk): single grid step (tiny output); row-shard for v7x megacore once the
    # classification batch is large enough to matter.
    return pl.pallas_call(
        _classifier_softmax_kernel,
        out_shape=jax.ShapeDtypeStruct((M, N), jnp.float32),
        in_specs=[
            pl.BlockSpec((M, K), lambda: (0, 0)),
            pl.BlockSpec((K, N), lambda: (0, 0)),
            pl.BlockSpec((1, N), lambda: (0, 0)),
        ],
        out_specs=pl.BlockSpec((M, N), lambda: (0, 0)),
        compiler_params=_cparams(0),
    )(x, w, b.reshape(1, N))


# ---------------------------------------------------------------------------
# Model glue (plain JAX): patchification, positional encoding, parameter handling
# ---------------------------------------------------------------------------

def sinusoidal_positional_encoding(seq_len, dim):
    pos = np.arange(seq_len, dtype=np.float32)[:, None]
    i = np.arange(dim, dtype=np.float32)[None, :]
    angle = pos / np.power(10000.0, (2.0 * np.floor(i / 2.0)) / dim)
    pe = np.zeros((seq_len, dim), dtype=np.float32)
    pe[:, 0::2] = np.sin(angle[:, 0::2])
    pe[:, 1::2] = np.cos(angle[:, 1::2])
    return jnp.asarray(pe)                       # (seq_len, dim)


def init_params(key, cfg, input_size, num_classes):
    E = cfg["embedded_size"]
    C = cfg["num_channels"]
    p = cfg["patch_size"]
    Hh = cfg["mlp_hidden_size"]
    keys = iter(jax.random.split(key, 256))

    def nrm(shape, s=0.02):
        return jax.random.normal(next(keys), shape, jnp.float32) * s

    params = {
        "cls_token": nrm((1, 1, E), 1.0),              # nn.Parameter(torch.randn)
        "proj_w": nrm((E, C, p, p)),                   # Conv2d weight (PyTorch layout)
        "proj_b": nrm((E,)),
        "cls_w": nrm((input_size, num_classes)),
        "cls_b": nrm((num_classes,)),
        "blocks": [],
    }
    for _ in range(cfg["transformer_blocks"]):
        params["blocks"].append({
            "ln1_g": jnp.ones((E,), jnp.float32), "ln1_b": jnp.zeros((E,), jnp.float32),
            "wq": nrm((E, E)), "bq": nrm((E,)),
            "wk": nrm((E, E)), "bk": nrm((E,)),
            "wv": nrm((E, E)), "bv": nrm((E,)),
            "wo": nrm((E, E)), "bo": nrm((E,)),
            "ln2_g": jnp.ones((E,), jnp.float32), "ln2_b": jnp.zeros((E,), jnp.float32),
            "w1": nrm((E, Hh)), "b1": nrm((Hh,)),
            "w2": nrm((Hh, E)), "b2": nrm((E,)),
        })
    return params


def prepare_params(params):
    """One-time: fuse Q|K|V weights, flatten conv weight to matmul layout, cast MXU
    weight operands to bf16 (biases / LN params stay f32)."""
    E = params["proj_w"].shape[0]
    out = {
        "cls_token": params["cls_token"],
        "proj_w": params["proj_w"].reshape(E, -1).T.astype(jnp.bfloat16),   # (C*p*p, E)
        "proj_b": params["proj_b"],
        "cls_w": params["cls_w"].astype(jnp.bfloat16),
        "cls_b": params["cls_b"],
        "blocks": [],
    }
    for blk in params["blocks"]:
        out["blocks"].append({
            "ln1_g": blk["ln1_g"], "ln1_b": blk["ln1_b"],
            "wqkv": jnp.concatenate([blk["wq"], blk["wk"], blk["wv"]],
                                    axis=1).astype(jnp.bfloat16),            # (E, 3E)
            "bqkv": jnp.concatenate([blk["bq"], blk["bk"], blk["bv"]], axis=0),
            "wo": blk["wo"].astype(jnp.bfloat16), "bo": blk["bo"],
            "ln2_g": blk["ln2_g"], "ln2_b": blk["ln2_b"],
            "w1": blk["w1"].astype(jnp.bfloat16), "b1": blk["b1"],
            "w2": blk["w2"].astype(jnp.bfloat16), "b2": blk["b2"],
        })
    return out


def vit_classification_forward(params, images, cfg):
    B, C, H, W = images.shape
    p = cfg["patch_size"]
    E = cfg["embedded_size"]
    nH = cfg["attention_heads"]
    Dh = E // nH
    Hp, Wp = H // p, W // p          # calculate_conv2d_output_dimensions (k = s = patch)
    N = Hp * Wp

    # --- VITPatchEncoder: Conv2d(k=s=patch) == patchify + matmul; PE fused in epilogue ---
    patches = images.reshape(B, C, Hp, p, Wp, p)
    patches = patches.transpose(0, 2, 4, 1, 3, 5).reshape(B * N, C * p * p)
    pe = sinusoidal_positional_encoding(N, E)
    emb = patch_embed(patches, params["proj_w"], params["proj_b"], pe, B, N)
    emb = emb.reshape(B, N, E)

    # CLS token concat; pad the token dim to a multiple of 8 so all downstream tiles are
    # sublane-aligned (pad key columns are masked inside attention; pad rows are discarded).
    cls = jnp.broadcast_to(params["cls_token"], (B, 1, E))
    x = jnp.concatenate([cls, emb], axis=1)                          # (B, N+1, E) f32
    S = N + 1
    Sp = ((S + 7) // 8) * 8
    if Sp != S:
        x = jnp.pad(x, ((0, 0), (0, Sp - S), (0, 0)))

    # --- VitModel transformer blocks: 2 fused pallas_calls per block ---
    # TODO(synk): TransformerBlock source was not provided; using a standard pre-LN MHA +
    # 2-layer ReLU MLP block with TransformerConfig sizes (dropout is identity at inference).
    for blk in params["blocks"]:
        x = attention_block(x, blk["ln1_g"], blk["ln1_b"], blk["wqkv"], blk["bqkv"],
                            blk["wo"], blk["bo"], num_heads=nH, head_dim=Dh, s_valid=S)
        x = mlp_block(x.reshape(B * Sp, E), blk["ln2_g"], blk["ln2_b"],
                      blk["w1"], blk["b1"], blk["w2"], blk["b2"]).reshape(B, Sp, E)

    # --- VitClassificationHead: Linear on CLS token + softmax (fused Pallas, exact) ---
    cls_out = x[:, 0, :]                                             # (B, E)
    probs = classifier_softmax(cls_out, params["cls_w"], params["cls_b"])
    return probs


# ---------------------------------------------------------------------------
if __name__ == "__main__":
    cfg = dict(
        transformer_blocks=2,
        image_size=16,
        patch_size=4,
        num_channels=3,
        encoder_stride=4,
        embedded_size=32,
        attention_heads=4,
        mlp_hidden_size=64,
        mlp_layers=2,
        activation_function="relu",
        dropout_prob=0.0,
        positional_embedding="sinusoidal",
    )
    input_size = cfg["embedded_size"]
    num_classes = 8
    batch = 2

    key = jax.random.PRNGKey(0)
    pkey, xkey = jax.random.split(key)
    raw_params = init_params(pkey, cfg, input_size, num_classes)
    params = prepare_params(raw_params)
    x = jax.random.normal(
        xkey, (batch, cfg["num_channels"], cfg["image_size"], cfg["image_size"]),
        dtype=jnp.float32)

    fwd = jax.jit(functools.partial(vit_classification_forward, cfg=cfg))
    probs = jax.block_until_ready(fwd(params, x))

    assert probs.shape == (batch, num_classes)
    # Exact softmax normalization in the classifier -> tight sum-to-one check.
    assert bool(jnp.allclose(jnp.sum(probs, axis=-1), 1.0, atol=1e-4))
    print("KERNEL_OK")
</pallas_src>

<mosaic_0001>
module attributes {stable_mosaic.version = 11 : i64} {
  func.func @_patch_embed_kernel(%arg0: i32, %arg1: memref<16x48xf32, #tpu.memory_space<vmem>>, %arg2: memref<48x32xbf16, #tpu.memory_space<vmem>>, %arg3: memref<1x32xf32, #tpu.memory_space<vmem>>, %arg4: memref<16x32xf32, #tpu.memory_space<vmem>>, %arg5: memref<16x32xf32, #tpu.memory_space<vmem>>) attributes {dimension_semantics = [#tpu.dimension_semantics<parallel>], iteration_bounds = array<i64: 2>, scalar_prefetch = 0 : i64, scratch_operands = 0 : i64, tpu.core_type = #tpu.core_type<tc>, window_params = [{transform_indices = @transform_0, window_bounds = array<i64: 16, 48>}, {pipeline_mode = #tpu.pipeline_mode<synchronous>, transform_indices = @transform_1, window_bounds = array<i64: 48, 32>}, {pipeline_mode = #tpu.pipeline_mode<synchronous>, transform_indices = @transform_2, window_bounds = array<i64: 1, 32>}, {pipeline_mode = #tpu.pipeline_mode<synchronous>, transform_indices = @transform_3, window_bounds = array<i64: 16, 32>}, {transform_indices = @transform_4, window_bounds = array<i64: 16, 32>}]} {
    %c0 = arith.constant 0 : index
    %c0_0 = arith.constant 0 : index
    %0 = vector.load %arg1[%c0, %c0_0] : memref<16x48xf32, #tpu.memory_space<vmem>>, vector<16x48xf32>
    %1 = arith.truncf %0 : vector<16x48xf32> to vector<16x48xbf16>
    %c0_1 = arith.constant 0 : index
    %c0_2 = arith.constant 0 : index
    %2 = vector.load %arg2[%c0_1, %c0_2] : memref<48x32xbf16, #tpu.memory_space<vmem>>, vector<48x32xbf16>
    %cst = arith.constant dense<0.000000e+00> : vector<16x32xf32>
    %3 = tpu.matmul %1, %2, %cst {dimension_numbers = #tpu.dot_dimension_numbers<[1], [0], [0], [1], [0, 0, 1, 1], [], []>} : vector<16x48xbf16>, vector<48x32xbf16>, vector<16x32xf32> -> vector<16x32xf32>
    %c0_3 = arith.constant 0 : index
    %c0_4 = arith.constant 0 : index
    %4 = vector.load %arg3[%c0_3, %c0_4] : memref<1x32xf32, #tpu.memory_space<vmem>>, vector<1x32xf32>
    %5 = vector.broadcast %4 : vector<1x32xf32> to vector<16x32xf32>
    %6 = arith.addf %3, %5 : vector<16x32xf32>
    %c0_5 = arith.constant 0 : index
    %c0_6 = arith.constant 0 : index
    %7 = vector.load %arg4[%c0_5, %c0_6] : memref<16x32xf32, #tpu.memory_space<vmem>>, vector<16x32xf32>
    %8 = arith.addf %6, %7 : vector<16x32xf32>
    %c0_7 = arith.constant 0 : index
    %c0_8 = arith.constant 0 : index
    %9 = vector.load %arg5[%c0_7, %c0_8] : memref<16x32xf32, #tpu.memory_space<vmem>>, vector<16x32xf32>
    tpu.vector_store %arg5[%c0_7, %c0_8], %8 {strides = array<i32>} : memref<16x32xf32, #tpu.memory_space<vmem>>, vector<16x32xf32>,
    return
  }
  func.func @transform_0(%arg0: i32) -> (i32, i32) {
    %c0_i32 = arith.constant 0 : i32
    %c0_i32_0 = arith.constant 0 : i32
    return %arg0, %c0_i32 : i32, i32
  }
  func.func @transform_1(%arg0: i32) -> (i32, i32) {
    %c0_i32 = arith.constant 0 : i32
    %c0_i32_0 = arith.constant 0 : i32
    %c0_i32_1 = arith.constant 0 : i32
    return %c0_i32, %c0_i32_0 : i32, i32
  }
  func.func @transform_2(%arg0: i32) -> (i32, i32) {
    %c0_i32 = arith.constant 0 : i32
    %c0_i32_0 = arith.constant 0 : i32
    %c0_i32_1 = arith.constant 0 : i32
    return %c0_i32, %c0_i32_0 : i32, i32
  }
  func.func @transform_3(%arg0: i32) -> (i32, i32) {
    %c0_i32 = arith.constant 0 : i32
    %c0_i32_0 = arith.constant 0 : i32
    %c0_i32_1 = arith.constant 0 : i32
    return %c0_i32, %c0_i32_0 : i32, i32
  }
  func.func @transform_4(%arg0: i32) -> (i32, i32) {
    %c0_i32 = arith.constant 0 : i32
    %c0_i32_0 = arith.constant 0 : i32
    return %arg0, %c0_i32 : i32, i32
  }
}

module attributes {stable_mosaic.version = 11 : i64} {
  func.func @_attn_block_kernel(%arg0: i32, %arg1: memref<1x24x32xf32, #tpu.memory_space<vmem>>, %arg2: memref<1x32xf32, #tpu.memory_space<vmem>>, %arg3: memref<1x32xf32, #tpu.memory_space<vmem>>, %arg4: memref<32x96xbf16, #tpu.memory_space<vmem>>, %arg5: memref<1x96xf32, #tpu.memory_space<vmem>>, %arg6: memref<32x32xbf16, #tpu.memory_space<vmem>>, %arg7: memref<1x32xf32, #tpu.memory_space<vmem>>, %arg8: memref<1x24x32xf32, #tpu.memory_space<vmem>>, %arg9: memref<24x96xbf16, #tpu.memory_space<vmem>>, %arg10: memref<24x32xbf16, #tpu.memory_space<vmem>>) attributes {dimension_semantics = [#tpu.dimension_semantics<parallel>], iteration_bounds = array<i64: 2>, scalar_prefetch = 0 : i64, scratch_operands = 2 : i64, tpu.core_type = #tpu.core_type<tc>, window_params = [{transform_indices = @transform_0, window_bounds = array<i64: 1, 24, 32>}, {pipeline_mode = #tpu.pipeline_mode<synchronous>, transform_indices = @transform_1, window_bounds = array<i64: 1, 32>}, {pipeline_mode = #tpu.pipeline_mode<synchronous>, transform_indices = @transform_2, window_bounds = array<i64: 1, 32>}, {pipeline_mode = #tpu.pipeline_mode<synchronous>, transform_indices = @transform_3, window_bounds = array<i64: 32, 96>}, {pipeline_mode = #tpu.pipeline_mode<synchronous>, transform_indices = @transform_4, window_bounds = array<i64: 1, 96>}, {pipeline_mode = #tpu.pipeline_mode<synchronous>, transform_indices = @transform_5, window_bounds = array<i64: 32, 32>}, {pipeline_mode = #tpu.pipeline_mode<synchronous>, transform_indices = @transform_6, window_bounds = array<i64: 1, 32>}, {transform_indices = @transform_7, window_bounds = array<i64: 1, 24, 32>}]} {
    %c0 = arith.constant 0 : index
    %c0_0 = arith.constant 0 : index
    %c0_1 = arith.constant 0 : index
    %0 = vector.load %arg1[%c0, %c0_0, %c0_1] : memref<1x24x32xf32, #tpu.memory_space<vmem>>, vector<1x24x32xf32>
    %1 = vector.shape_cast %0 : vector<1x24x32xf32> to vector<24x32xf32>
    %cst = arith.constant dense<0.000000e+00> : vector<24xf32>
    %2 = vector.multi_reduction <add>, %1, %cst [1] : vector<24x32xf32> to vector<24xf32>
    %3 = vector.shape_cast %2 : vector<24xf32> to vector<24x1xf32>
    %cst_2 = arith.constant 3.200000e+01 : f32
    %4 = vector.broadcast %cst_2 : f32 to vector<24x1xf32>
    %5 = arith.divf %3, %4 : vector<24x1xf32>
    %6 = vector.broadcast %5 : vector<24x1xf32> to vector<24x32xf32>
    %7 = arith.subf %1, %6 : vector<24x32xf32>
    %8 = arith.mulf %7, %7 : vector<24x32xf32>
    %cst_3 = arith.constant dense<0.000000e+00> : vector<24xf32>
    %9 = vector.multi_reduction <add>, %8, %cst_3 [1] : vector<24x32xf32> to vector<24xf32>
    %10 = vector.shape_cast %9 : vector<24xf32> to vector<24x1xf32>
    %cst_4 = arith.constant 3.200000e+01 : f32
    %11 = vector.broadcast %cst_4 : f32 to vector<24x1xf32>
    %12 = arith.divf %10, %11 : vector<24x1xf32>
    %13 = vector.broadcast %5 : vector<24x1xf32> to vector<24x32xf32>
    %14 = arith.subf %1, %13 : vector<24x32xf32>
    %cst_5 = arith.constant 9.99999974E-6 : f32
    %15 = vector.broadcast %cst_5 : f32 to vector<24x1xf32>
    %16 = arith.addf %12, %15 : vector<24x1xf32>
    %17 = math.rsqrt %16 : vector<24x1xf32>
    %18 = vector.broadcast %17 : vector<24x1xf32> to vector<24x32xf32>
    %19 = arith.mulf %14, %18 : vector<24x32xf32>
    %c0_6 = arith.constant 0 : index
    %c0_7 = arith.constant 0 : index
    %20 = vector.load %arg2[%c0_6, %c0_7] : memref<1x32xf32, #tpu.memory_space<vmem>>, vector<1x32xf32>
    %21 = vector.broadcast %20 : vector<1x32xf32> to vector<24x32xf32>
    %22 = arith.mulf %19, %21 : vector<24x32xf32>
    %c0_8 = arith.constant 0 : index
    %c0_9 = arith.constant 0 : index
    %23 = vector.load %arg3[%c0_8, %c0_9] : memref<1x32xf32, #tpu.memory_space<vmem>>, vector<1x32xf32>
    %24 = vector.broadcast %23 : vector<1x32xf32> to vector<24x32xf32>
    %25 = arith.addf %22, %24 : vector<24x32xf32>
    %26 = arith.truncf %25 : vector<24x32xf32> to vector<24x32xbf16>
    %c0_10 = arith.constant 0 : index
    %c0_11 = arith.constant 0 : index
    %27 = vector.load %arg4[%c0_10, %c0_11] : memref<32x96xbf16, #tpu.memory_space<vmem>>, vector<32x96xbf16>
    %cst_12 = arith.constant dense<0.000000e+00> : vector<24x96xf32>
    %28 = tpu.matmul %26, %27, %cst_12 {dimension_numbers = #tpu.dot_dimension_numbers<[1], [0], [0], [1], [0, 0, 1, 1], [], []>} : vector<24x32xbf16>, vector<32x96xbf16>, vector<24x96xf32> -> vector<24x96xf32>
    %c0_13 = arith.constant 0 : index
    %c0_14 = arith.constant 0 : index
    %29 = vector.load %arg5[%c0_13, %c0_14] : memref<1x96xf32, #tpu.memory_space<vmem>>, vector<1x96xf32>
    %30 = vector.broadcast %29 : vector<1x96xf32> to vector<24x96xf32>
    %31 = arith.addf %28, %30 : vector<24x96xf32>
    %32 = arith.truncf %31 : vector<24x96xf32> to vector<24x96xbf16>
    %c0_15 = arith.constant 0 : index
    %c0_16 = arith.constant 0 : index
    %33 = vector.load %arg9[%c0_15, %c0_16] : memref<24x96xbf16, #tpu.memory_space<vmem>>, vector<24x96xbf16>
    tpu.vector_store %arg9[%c0_15, %c0_16], %32 {strides = array<i32>} : memref<24x96xbf16, #tpu.memory_space<vmem>>, vector<24x96xbf16>,
    %34 = tpu.iota {dimensions = array<i32: 1>} : vector<24x24xi32>
    %c17_i32 = arith.constant 17 : i32
    %35 = vector.broadcast %c17_i32 : i32 to vector<24x24xi32>
    %36 = arith.cmpi slt, %34, %35 : vector<24x24xi32>
    %cst_17 = arith.constant 0.000000e+00 : f32
    %cst_18 = arith.constant -1.000000e+30 : f32
    %37 = vector.broadcast %cst_17 : f32 to vector<24x24xf32>
    %38 = vector.broadcast %cst_18 : f32 to vector<24x24xf32>
    %39 = arith.select %36, %37, %38 : vector<24x24xi1>, vector<24x24xf32>
    %c0_19 = arith.constant 0 : index
    %c0_20 = arith.constant 0 : index
    %40 = vector.load %arg9[%c0_19, %c0_20] : memref<24x96xbf16, #tpu.memory_space<vmem>>, vector<24x8xbf16>
    %c0_21 = arith.constant 0 : index
    %c32 = arith.constant 32 : index
    %41 = vector.load %arg9[%c0_21, %c32] : memref<24x96xbf16, #tpu.memory_space<vmem>>, vector<24x8xbf16>
    %c0_22 = arith.constant 0 : index
    %c64 = arith.constant 64 : index
    %42 = vector.load %arg9[%c0_22, %c64] : memref<24x96xbf16, #tpu.memory_space<vmem>>, vector<24x8xbf16>
    %cst_23 = arith.constant dense<0.000000e+00> : vector<24x24xf32>
    %43 = tpu.matmul %40, %41, %cst_23 {dimension_numbers = #tpu.dot_dimension_numbers<[1], [1], [0], [0], [0, 0, 1, 0], [], []>} : vector<24x8xbf16>, vector<24x8xbf16>, vector<24x24xf32> -> vector<24x24xf32>
    %cst_24 = arith.constant 0.353553385 : f32
    %44 = vector.broadcast %cst_24 : f32 to vector<24x24xf32>
    %45 = arith.mulf %43, %44 : vector<24x24xf32>
    %46 = arith.addf %45, %39 : vector<24x24xf32>
    %cst_25 = arith.constant dense<0xFF800000> : vector<24xf32>
    %47 = vector.multi_reduction <maximumf>, %46, %cst_25 [1] : vector<24x24xf32> to vector<24xf32>
    %48 = vector.shape_cast %47 : vector<24xf32> to vector<24x1xf32>
    %49 = vector.broadcast %48 : vector<24x1xf32> to vector<24x24xf32>
    %50 = arith.subf %46, %49 : vector<24x24xf32>
    %51 = math.exp %50 : vector<24x24xf32>
    %cst_26 = arith.constant dense<0.000000e+00> : vector<24xf32>
    %52 = vector.multi_reduction <add>, %51, %cst_26 [1] : vector<24x24xf32> to vector<24xf32>
    %53 = vector.shape_cast %52 : vector<24xf32> to vector<24x1xf32>
    %54 = tpu.reciprocal %53 {approx = true} : vector<24x1xf32> -> vector<24x1xf32>
    %55 = vector.broadcast %54 : vector<24x1xf32> to vector<24x24xf32>
    %56 = arith.mulf %51, %55 : vector<24x24xf32>
    %57 = arith.truncf %56 : vector<24x24xf32> to vector<24x24xbf16>
    %cst_27 = arith.constant dense<0.000000e+00> : vector<24x8xf32>
    %58 = tpu.matmul %57, %42, %cst_27 {dimension_numbers = #tpu.dot_dimension_numbers<[1], [0], [0], [1], [0, 0, 1, 1], [], []>} : vector<24x24xbf16>, vector<24x8xbf16>, vector<24x8xf32> -> vector<24x8xf32>
    %59 = arith.truncf %58 : vector<24x8xf32> to vector<24x8xbf16>
    %c0_28 = arith.constant 0 : index
    %c0_29 = arith.constant 0 : index
    %60 = vector.load %arg10[%c0_28, %c0_29] : memref<24x32xbf16, #tpu.memory_space<vmem>>, vector<24x8xbf16>
    tpu.vector_store %arg10[%c0_28, %c0_29], %59 {strides = array<i32>} : memref<24x32xbf16, #tpu.memory_space<vmem>>, vector<24x8xbf16>,
    %c0_30 = arith.constant 0 : index
    %c8 = arith.constant 8 : index
    %61 = vector.load %arg9[%c0_30, %c8] : memref<24x96xbf16, #tpu.memory_space<vmem>>, vector<24x8xbf16>
    %c0_31 = arith.constant 0 : index
    %c40 = arith.constant 40 : index
    %62 = vector.load %arg9[%c0_31, %c40] : memref<24x96xbf16, #tpu.memory_space<vmem>>, vector<24x8xbf16>
    %c0_32 = arith.constant 0 : index
    %c72 = arith.constant 72 : index
    %63 = vector.load %arg9[%c0_32, %c72] : memref<24x96xbf16, #tpu.memory_space<vmem>>, vector<24x8xbf16>
    %cst_33 = arith.constant dense<0.000000e+00> : vector<24x24xf32>
    %64 = tpu.matmul %61, %62, %cst_33 {dimension_numbers = #tpu.dot_dimension_numbers<[1], [1], [0], [0], [0, 0, 1, 0], [], []>} : vector<24x8xbf16>, vector<24x8xbf16>, vector<24x24xf32> -> vector<24x24xf32>
    %cst_34 = arith.constant 0.353553385 : f32
    %65 = vector.broadcast %cst_34 : f32 to vector<24x24xf32>
    %66 = arith.mulf %64, %65 : vector<24x24xf32>
    %67 = arith.addf %66, %39 : vector<24x24xf32>
    %cst_35 = arith.constant dense<0xFF800000> : vector<24xf32>
    %68 = vector.multi_reduction <maximumf>, %67, %cst_35 [1] : vector<24x24xf32> to vector<24xf32>
    %69 = vector.shape_cast %68 : vector<24xf32> to vector<24x1xf32>
    %70 = vector.broadcast %69 : vector<24x1xf32> to vector<24x24xf32>
    %71 = arith.subf %67, %70 : vector<24x24xf32>
    %72 = math.exp %71 : vector<24x24xf32>
    %cst_36 = arith.constant dense<0.000000e+00> : vector<24xf32>
    %73 = vector.multi_reduction <add>, %72, %cst_36 [1] : vector<24x24xf32> to vector<24xf32>
    %74 = vector.shape_cast %73 : vector<24xf32> to vector<24x1xf32>
    %75 = tpu.reciprocal %74 {approx = true} : vector<24x1xf32> -> vector<24x1xf32>
    %76 = vector.broadcast %75 : vector<24x1xf32> to vector<24x24xf32>
    %77 = arith.mulf %72, %76 : vector<24x24xf32>
    %78 = arith.truncf %77 : vector<24x24xf32> to vector<24x24xbf16>
    %cst_37 = arith.constant dense<0.000000e+00> : vector<24x8xf32>
    %79 = tpu.matmul %78, %63, %cst_37 {dimension_numbers = #tpu.dot_dimension_numbers<[1], [0], [0], [1], [0, 0, 1, 1], [], []>} : vector<24x24xbf16>, vector<24x8xbf16>, vector<24x8xf32> -> vector<24x8xf32>
    %80 = arith.truncf %79 : vector<24x8xf32> to vector<24x8xbf16>
    %c0_38 = arith.constant 0 : index
    %c8_39 = arith.constant 8 : index
    %81 = vector.load %arg10[%c0_38, %c8_39] : memref<24x32xbf16, #tpu.memory_space<vmem>>, vector<24x8xbf16>
    tpu.vector_store %arg10[%c0_38, %c8_39], %80 {strides = array<i32>} : memref<24x32xbf16, #tpu.memory_space<vmem>>, vector<24x8xbf16>,
    %c0_40 = arith.constant 0 : index
    %c16 = arith.constant 16 : index
    %82 = vector.load %arg9[%c0_40, %c16] : memref<24x96xbf16, #tpu.memory_space<vmem>>, vector<24x8xbf16>
    %c0_41 = arith.constant 0 : index
    %c48 = arith.constant 48 : index
    %83 = vector.load %arg9[%c0_41, %c48] : memref<24x96xbf16, #tpu.memory_space<vmem>>, vector<24x8xbf16>
    %c0_42 = arith.constant 0 : index
    %c80 = arith.constant 80 : index
    %84 = vector.load %arg9[%c0_42, %c80] : memref<24x96xbf16, #tpu.memory_space<vmem>>, vector<24x8xbf16>
    %cst_43 = arith.constant dense<0.000000e+00> : vector<24x24xf32>
    %85 = tpu.matmul %82, %83, %cst_43 {dimension_numbers = #tpu.dot_dimension_numbers<[1], [1], [0], [0], [0, 0, 1, 0], [], []>} : vector<24x8xbf16>, vector<24x8xbf16>, vector<24x24xf32> -> vector<24x24xf32>
    %cst_44 = arith.constant 0.353553385 : f32
    %86 = vector.broadcast %cst_44 : f32 to vector<24x24xf32>
    %87 = arith.mulf %85, %86 : vector<24x24xf32>
    %88 = arith.addf %87, %39 : vector<24x24xf32>
    %cst_45 = arith.constant dense<0xFF800000> : vector<24xf32>
    %89 = vector.multi_reduction <maximumf>, %88, %cst_45 [1] : vector<24x24xf32> to vector<24xf32>
    %90 = vector.shape_cast %89 : vector<24xf32> to vector<24x1xf32>
    %91 = vector.broadcast %90 : vector<24x1xf32> to vector<24x24xf32>
    %92 = arith.subf %88, %91 : vector<24x24xf32>
    %93 = math.exp %92 : vector<24x24xf32>
    %cst_46 = arith.constant dense<0.000000e+00> : vector<24xf32>
    %94 = vector.multi_reduction <add>, %93, %cst_46 [1] : vector<24x24xf32> to vector<24xf32>
    %95 = vector.shape_cast %94 : vector<24xf32> to vector<24x1xf32>
    %96 = tpu.reciprocal %95 {approx = true} : vector<24x1xf32> -> vector<24x1xf32>
    %97 = vector.broadcast %96 : vector<24x1xf32> to vector<24x24xf32>
    %98 = arith.mulf %93, %97 : vector<24x24xf32>
    %99 = arith.truncf %98 : vector<24x24xf32> to vector<24x24xbf16>
    %cst_47 = arith.constant dense<0.000000e+00> : vector<24x8xf32>
    %100 = tpu.matmul %99, %84, %cst_47 {dimension_numbers = #tpu.dot_dimension_numbers<[1], [0], [0], [1], [0, 0, 1, 1], [], []>} : vector<24x24xbf16>, vector<24x8xbf16>, vector<24x8xf32> -> vector<24x8xf32>
    %101 = arith.truncf %100 : vector<24x8xf32> to vector<24x8xbf16>
    %c0_48 = arith.constant 0 : index
    %c16_49 = arith.constant 16 : index
    %102 = vector.load %arg10[%c0_48, %c16_49] : memref<24x32xbf16, #tpu.memory_space<vmem>>, vector<24x8xbf16>
    tpu.vector_store %arg10[%c0_48, %c16_49], %101 {strides = array<i32>} : memref<24x32xbf16, #tpu.memory_space<vmem>>, vector<24x8xbf16>,
    %c0_50 = arith.constant 0 : index
    %c24 = arith.constant 24 : index
    %103 = vector.load %arg9[%c0_50, %c24] : memref<24x96xbf16, #tpu.memory_space<vmem>>, vector<24x8xbf16>
    %c0_51 = arith.constant 0 : index
    %c56 = arith.constant 56 : index
    %104 = vector.load %arg9[%c0_51, %c56] : memref<24x96xbf16, #tpu.memory_space<vmem>>, vector<24x8xbf16>
    %c0_52 = arith.constant 0 : index
    %c88 = arith.constant 88 : index
    %105 = vector.load %arg9[%c0_52, %c88] : memref<24x96xbf16, #tpu.memory_space<vmem>>, vector<24x8xbf16>
    %cst_53 = arith.constant dense<0.000000e+00> : vector<24x24xf32>
    %106 = tpu.matmul %103, %104, %cst_53 {dimension_numbers = #tpu.dot_dimension_numbers<[1], [1], [0], [0], [0, 0, 1, 0], [], []>} : vector<24x8xbf16>, vector<24x8xbf16>, vector<24x24xf32> -> vector<24x24xf32>
    %cst_54 = arith.constant 0.353553385 : f32
    %107 = vector.broadcast %cst_54 : f32 to vector<24x24xf32>
    %108 = arith.mulf %106, %107 : vector<24x24xf32>
    %109 = arith.addf %108, %39 : vector<24x24xf32>
    %cst_55 = arith.constant dense<0xFF800000> : vector<24xf32>
    %110 = vector.multi_reduction <maximumf>, %109, %cst_55 [1] : vector<24x24xf32> to vector<24xf32>
    %111 = vector.shape_cast %110 : vector<24xf32> to vector<24x1xf32>
    %112 = vector.broadcast %111 : vector<24x1xf32> to vector<24x24xf32>
    %113 = arith.subf %109, %112 : vector<24x24xf32>
    %114 = math.exp %113 : vector<24x24xf32>
    %cst_56 = arith.constant dense<0.000000e+00> : vector<24xf32>
    %115 = vector.multi_reduction <add>, %114, %cst_56 [1] : vector<24x24xf32> to vector<24xf32>
    %116 = vector.shape_cast %115 : vector<24xf32> to vector<24x1xf32>
    %117 = tpu.reciprocal %116 {approx = true} : vector<24x1xf32> -> vector<24x1xf32>
    %118 = vector.broadcast %117 : vector<24x1xf32> to vector<24x24xf32>
    %119 = arith.mulf %114, %118 : vector<24x24xf32>
    %120 = arith.truncf %119 : vector<24x24xf32> to vector<24x24xbf16>
    %cst_57 = arith.constant dense<0.000000e+00> : vector<24x8xf32>
    %121 = tpu.matmul %120, %105, %cst_57 {dimension_numbers = #tpu.dot_dimension_numbers<[1], [0], [0], [1], [0, 0, 1, 1], [], []>} : vector<24x24xbf16>, vector<24x8xbf16>, vector<24x8xf32> -> vector<24x8xf32>
    %122 = arith.truncf %121 : vector<24x8xf32> to vector<24x8xbf16>
    %c0_58 = arith.constant 0 : index
    %c24_59 = arith.constant 24 : index
    %123 = vector.load %arg10[%c0_58, %c24_59] : memref<24x32xbf16, #tpu.memory_space<vmem>>, vector<24x8xbf16>
    tpu.vector_store %arg10[%c0_58, %c24_59], %122 {strides = array<i32>} : memref<24x32xbf16, #tpu.memory_space<vmem>>, vector<24x8xbf16>,
    %c0_60 = arith.constant 0 : index
    %c0_61 = arith.constant 0 : index
    %124 = vector.load %arg10[%c0_60, %c0_61] : memref<24x32xbf16, #tpu.memory_space<vmem>>, vector<24x32xbf16>
    %c0_62 = arith.constant 0 : index
    %c0_63 = arith.constant 0 : index
    %125 = vector.load %arg6[%c0_62, %c0_63] : memref<32x32xbf16, #tpu.memory_space<vmem>>, vector<32x32xbf16>
    %cst_64 = arith.constant dense<0.000000e+00> : vector<24x32xf32>
    %126 = tpu.matmul %124, %125, %cst_64 {dimension_numbers = #tpu.dot_dimension_numbers<[1], [0], [0], [1], [0, 0, 1, 1], [], []>} : vector<24x32xbf16>, vector<32x32xbf16>, vector<24x32xf32> -> vector<24x32xf32>
    %c0_65 = arith.constant 0 : index
    %c0_66 = arith.constant 0 : index
    %127 = vector.load %arg7[%c0_65, %c0_66] : memref<1x32xf32, #tpu.memory_space<vmem>>, vector<1x32xf32>
    %128 = vector.broadcast %127 : vector<1x32xf32> to vector<24x32xf32>
    %129 = arith.addf %126, %128 : vector<24x32xf32>
    %130 = arith.addf %129, %1 : vector<24x32xf32>
    %c0_67 = arith.constant 0 : index
    %c0_68 = arith.constant 0 : index
    %c0_69 = arith.constant 0 : index
    %131 = vector.load %arg8[%c0_67, %c0_68, %c0_69] : memref<1x24x32xf32, #tpu.memory_space<vmem>>, vector<1x24x32xf32>
    %132 = vector.shape_cast %131 : vector<1x24x32xf32> to vector<24x32xf32>
    %133 = vector.shape_cast %130 : vector<24x32xf32> to vector<1x24x32xf32>
    tpu.vector_store %arg8[%c0_67, %c0_68, %c0_69], %133 {strides = array<i32>} : memref<1x24x32xf32, #tpu.memory_space<vmem>>, vector<1x24x32xf32>,
    return
  }
  func.func @transform_0(%arg0: i32) -> (i32, i32, i32) {
    %c0_i32 = arith.constant 0 : i32
    %c0_i32_0 = arith.constant 0 : i32
    %c0_i32_1 = arith.constant 0 : i32
    return %arg0, %c0_i32, %c0_i32_0 : i32, i32, i32
  }
  func.func @transform_1(%arg0: i32) -> (i32, i32) {
    %c0_i32 = arith.constant 0 : i32
    %c0_i32_0 = arith.constant 0 : i32
    %c0_i32_1 = arith.constant 0 : i32
    return %c0_i32, %c0_i32_0 : i32, i32
  }
  func.func @transform_2(%arg0: i32) -> (i32, i32) {
    %c0_i32 = arith.constant 0 : i32
    %c0_i32_0 = arith.constant 0 : i32
    %c0_i32_1 = arith.constant 0 : i32
    return %c0_i32, %c0_i32_0 : i32, i32
  }
  func.func @transform_3(%arg0: i32) -> (i32, i32) {
    %c0_i32 = arith.constant 0 : i32
    %c0_i32_0 = arith.constant 0 : i32
    %c0_i32_1 = arith.constant 0 : i32
    return %c0_i32, %c0_i32_0 : i32, i32
  }
  func.func @transform_4(%arg0: i32) -> (i32, i32) {
    %c0_i32 = arith.constant 0 : i32
    %c0_i32_0 = arith.constant 0 : i32
    %c0_i32_1 = arith.constant 0 : i32
    return %c0_i32, %c0_i32_0 : i32, i32
  }
  func.func @transform_5(%arg0: i32) -> (i32, i32) {
    %c0_i32 = arith.constant 0 : i32
    %c0_i32_0 = arith.constant 0 : i32
    %c0_i32_1 = arith.constant 0 : i32
    return %c0_i32, %c0_i32_0 : i32, i32
  }
  func.func @transform_6(%arg0: i32) -> (i32, i32) {
    %c0_i32 = arith.constant 0 : i32
    %c0_i32_0 = arith.constant 0 : i32
    %c0_i32_1 = arith.constant 0 : i32
    return %c0_i32, %c0_i32_0 : i32, i32
  }
  func.func @transform_7(%arg0: i32) -> (i32, i32, i32) {
    %c0_i32 = arith.constant 0 : i32
    %c0_i32_0 = arith.constant 0 : i32
    %c0_i32_1 = arith.constant 0 : i32
    return %arg0, %c0_i32, %c0_i32_0 : i32, i32, i32
  }
}

module attributes {stable_mosaic.version = 11 : i64} {
  func.func @_mlp_block_kernel(%arg0: i32, %arg1: memref<24x32xf32, #tpu.memory_space<vmem>>, %arg2: memref<1x32xf32, #tpu.memory_space<vmem>>, %arg3: memref<1x32xf32, #tpu.memory_space<vmem>>, %arg4: memref<32x64xbf16, #tpu.memory_space<vmem>>, %arg5: memref<1x64xf32, #tpu.memory_space<vmem>>, %arg6: memref<64x32xbf16, #tpu.memory_space<vmem>>, %arg7: memref<1x32xf32, #tpu.memory_space<vmem>>, %arg8: memref<24x32xf32, #tpu.memory_space<vmem>>) attributes {dimension_semantics = [#tpu.dimension_semantics<parallel>], iteration_bounds = array<i64: 2>, scalar_prefetch = 0 : i64, scratch_operands = 0 : i64, tpu.core_type = #tpu.core_type<tc>, window_params = [{transform_indices = @transform_0, window_bounds = array<i64: 24, 32>}, {pipeline_mode = #tpu.pipeline_mode<synchronous>, transform_indices = @transform_1, window_bounds = array<i64: 1, 32>}, {pipeline_mode = #tpu.pipeline_mode<synchronous>, transform_indices = @transform_2, window_bounds = array<i64: 1, 32>}, {pipeline_mode = #tpu.pipeline_mode<synchronous>, transform_indices = @transform_3, window_bounds = array<i64: 32, 64>}, {pipeline_mode = #tpu.pipeline_mode<synchronous>, transform_indices = @transform_4, window_bounds = array<i64: 1, 64>}, {pipeline_mode = #tpu.pipeline_mode<synchronous>, transform_indices = @transform_5, window_bounds = array<i64: 64, 32>}, {pipeline_mode = #tpu.pipeline_mode<synchronous>, transform_indices = @transform_6, window_bounds = array<i64: 1, 32>}, {transform_indices = @transform_7, window_bounds = array<i64: 24, 32>}]} {
    %c0 = arith.constant 0 : index
    %c0_0 = arith.constant 0 : index
    %0 = vector.load %arg1[%c0, %c0_0] : memref<24x32xf32, #tpu.memory_space<vmem>>, vector<24x32xf32>
    %cst = arith.constant dense<0.000000e+00> : vector<24xf32>
    %1 = vector.multi_reduction <add>, %0, %cst [1] : vector<24x32xf32> to vector<24xf32>
    %2 = vector.shape_cast %1 : vector<24xf32> to vector<24x1xf32>
    %cst_1 = arith.constant 3.200000e+01 : f32
    %3 = vector.broadcast %cst_1 : f32 to vector<24x1xf32>
    %4 = arith.divf %2, %3 : vector<24x1xf32>
    %5 = vector.broadcast %4 : vector<24x1xf32> to vector<24x32xf32>
    %6 = arith.subf %0, %5 : vector<24x32xf32>
    %7 = arith.mulf %6, %6 : vector<24x32xf32>
    %cst_2 = arith.constant dense<0.000000e+00> : vector<24xf32>
    %8 = vector.multi_reduction <add>, %7, %cst_2 [1] : vector<24x32xf32> to vector<24xf32>
    %9 = vector.shape_cast %8 : vector<24xf32> to vector<24x1xf32>
    %cst_3 = arith.constant 3.200000e+01 : f32
    %10 = vector.broadcast %cst_3 : f32 to vector<24x1xf32>
    %11 = arith.divf %9, %10 : vector<24x1xf32>
    %12 = vector.broadcast %4 : vector<24x1xf32> to vector<24x32xf32>
    %13 = arith.subf %0, %12 : vector<24x32xf32>
    %cst_4 = arith.constant 9.99999974E-6 : f32
    %14 = vector.broadcast %cst_4 : f32 to vector<24x1xf32>
    %15 = arith.addf %11, %14 : vector<24x1xf32>
    %16 = math.rsqrt %15 : vector<24x1xf32>
    %17 = vector.broadcast %16 : vector<24x1xf32> to vector<24x32xf32>
    %18 = arith.mulf %13, %17 : vector<24x32xf32>
    %c0_5 = arith.constant 0 : index
    %c0_6 = arith.constant 0 : index
    %19 = vector.load %arg2[%c0_5, %c0_6] : memref<1x32xf32, #tpu.memory_space<vmem>>, vector<1x32xf32>
    %20 = vector.broadcast %19 : vector<1x32xf32> to vector<24x32xf32>
    %21 = arith.mulf %18, %20 : vector<24x32xf32>
    %c0_7 = arith.constant 0 : index
    %c0_8 = arith.constant 0 : index
    %22 = vector.load %arg3[%c0_7, %c0_8] : memref<1x32xf32, #tpu.memory_space<vmem>>, vector<1x32xf32>
    %23 = vector.broadcast %22 : vector<1x32xf32> to vector<24x32xf32>
    %24 = arith.addf %21, %23 : vector<24x32xf32>
    %25 = arith.truncf %24 : vector<24x32xf32> to vector<24x32xbf16>
    %c0_9 = arith.constant 0 : index
    %c0_10 = arith.constant 0 : index
    %26 = vector.load %arg4[%c0_9, %c0_10] : memref<32x64xbf16, #tpu.memory_space<vmem>>, vector<32x64xbf16>
    %cst_11 = arith.constant dense<0.000000e+00> : vector<24x64xf32>
    %27 = tpu.matmul %25, %26, %cst_11 {dimension_numbers = #tpu.dot_dimension_numbers<[1], [0], [0], [1], [0, 0, 1, 1], [], []>} : vector<24x32xbf16>, vector<32x64xbf16>, vector<24x64xf32> -> vector<24x64xf32>
    %c0_12 = arith.constant 0 : index
    %c0_13 = arith.constant 0 : index
    %28 = vector.load %arg5[%c0_12, %c0_13] : memref<1x64xf32, #tpu.memory_space<vmem>>, vector<1x64xf32>
    %29 = vector.broadcast %28 : vector<1x64xf32> to vector<24x64xf32>
    %30 = arith.addf %27, %29 : vector<24x64xf32>
    %cst_14 = arith.constant 0.000000e+00 : f32
    %31 = vector.broadcast %cst_14 : f32 to vector<24x64xf32>
    %32 = arith.maximumf %30, %31 : vector<24x64xf32>
    %33 = arith.truncf %32 : vector<24x64xf32> to vector<24x64xbf16>
    %c0_15 = arith.constant 0 : index
    %c0_16 = arith.constant 0 : index
    %34 = vector.load %arg6[%c0_15, %c0_16] : memref<64x32xbf16, #tpu.memory_space<vmem>>, vector<64x32xbf16>
    %cst_17 = arith.constant dense<0.000000e+00> : vector<24x32xf32>
    %35 = tpu.matmul %33, %34, %cst_17 {dimension_numbers = #tpu.dot_dimension_numbers<[1], [0], [0], [1], [0, 0, 1, 1], [], []>} : vector<24x64xbf16>, vector<64x32xbf16>, vector<24x32xf32> -> vector<24x32xf32>
    %c0_18 = arith.constant 0 : index
    %c0_19 = arith.constant 0 : index
    %36 = vector.load %arg7[%c0_18, %c0_19] : memref<1x32xf32, #tpu.memory_space<vmem>>, vector<1x32xf32>
    %37 = vector.broadcast %36 : vector<1x32xf32> to vector<24x32xf32>
    %38 = arith.addf %35, %37 : vector<24x32xf32>
    %39 = arith.addf %38, %0 : vector<24x32xf32>
    %c0_20 = arith.constant 0 : index
    %c0_21 = arith.constant 0 : index
    %40 = vector.load %arg8[%c0_20, %c0_21] : memref<24x32xf32, #tpu.memory_space<vmem>>, vector<24x32xf32>
    tpu.vector_store %arg8[%c0_20, %c0_21], %39 {strides = array<i32>} : memref<24x32xf32, #tpu.memory_space<vmem>>, vector<24x32xf32>,
    return
  }
  func.func @transform_0(%arg0: i32) -> (i32, i32) {
    %c0_i32 = arith.constant 0 : i32
    %c0_i32_0 = arith.constant 0 : i32
    return %arg0, %c0_i32 : i32, i32
  }
  func.func @transform_1(%arg0: i32) -> (i32, i32) {
    %c0_i32 = arith.constant 0 : i32
    %c0_i32_0 = arith.constant 0 : i32
    %c0_i32_1 = arith.constant 0 : i32
    return %c0_i32, %c0_i32_0 : i32, i32
  }
  func.func @transform_2(%arg0: i32) -> (i32, i32) {
    %c0_i32 = arith.constant 0 : i32
    %c0_i32_0 = arith.constant 0 : i32
    %c0_i32_1 = arith.constant 0 : i32
    return %c0_i32, %c0_i32_0 : i32, i32
  }
  func.func @transform_3(%arg0: i32) -> (i32, i32) {
    %c0_i32 = arith.constant 0 : i32
    %c0_i32_0 = arith.constant 0 : i32
    %c0_i32_1 = arith.constant 0 : i32
    return %c0_i32, %c0_i32_0 : i32, i32
  }
  func.func @transform_4(%arg0: i32) -> (i32, i32) {
    %c0_i32 = arith.constant 0 : i32
    %c0_i32_0 = arith.constant 0 : i32
    %c0_i32_1 = arith.constant 0 : i32
    return %c0_i32, %c0_i32_0 : i32, i32
  }
  func.func @transform_5(%arg0: i32) -> (i32, i32) {
    %c0_i32 = arith.constant 0 : i32
    %c0_i32_0 = arith.constant 0 : i32
    %c0_i32_1 = arith.constant 0 : i32
    return %c0_i32, %c0_i32_0 : i32, i32
  }
  func.func @transform_6(%arg0: i32) -> (i32, i32) {
    %c0_i32 = arith.constant 0 : i32
    %c0_i32_0 = arith.constant 0 : i32
    %c0_i32_1 = arith.constant 0 : i32
    return %c0_i32, %c0_i32_0 : i32, i32
  }
  func.func @transform_7(%arg0: i32) -> (i32, i32) {
    %c0_i32 = arith.constant 0 : i32
    %c0_i32_0 = arith.constant 0 : i32
    return %arg0, %c0_i32 : i32, i32
  }
}

module attributes {stable_mosaic.version = 11 : i64} {
  func.func @_classifier_softmax_kernel(%arg0: memref<2x32xf32, #tpu.memory_space<vmem>>, %arg1: memref<32x8xbf16, #tpu.memory_space<vmem>>, %arg2: memref<1x8xf32, #tpu.memory_space<vmem>>, %arg3: memref<2x8xf32, #tpu.memory_space<vmem>>) attributes {dimension_semantics = [], scalar_prefetch = 0 : i64, scratch_operands = 0 : i64, tpu.core_type = #tpu.core_type<tc>} {
    %c0 = arith.constant 0 : index
    %c0_0 = arith.constant 0 : index
    %0 = vector.load %arg0[%c0, %c0_0] : memref<2x32xf32, #tpu.memory_space<vmem>>, vector<2x32xf32>
    %1 = arith.truncf %0 : vector<2x32xf32> to vector<2x32xbf16>
    %c0_1 = arith.constant 0 : index
    %c0_2 = arith.constant 0 : index
    %2 = vector.load %arg1[%c0_1, %c0_2] : memref<32x8xbf16, #tpu.memory_space<vmem>>, vector<32x8xbf16>
    %cst = arith.constant dense<0.000000e+00> : vector<2x8xf32>
    %3 = tpu.matmul %1, %2, %cst {dimension_numbers = #tpu.dot_dimension_numbers<[1], [0], [0], [1], [0, 0, 1, 1], [], []>} : vector<2x32xbf16>, vector<32x8xbf16>, vector<2x8xf32> -> vector<2x8xf32>
    %c0_3 = arith.constant 0 : index
    %c0_4 = arith.constant 0 : index
    %4 = vector.load %arg2[%c0_3, %c0_4] : memref<1x8xf32, #tpu.memory_space<vmem>>, vector<1x8xf32>
    %5 = vector.broadcast %4 : vector<1x8xf32> to vector<2x8xf32>
    %6 = arith.addf %3, %5 : vector<2x8xf32>
    %cst_5 = arith.constant dense<0xFF800000> : vector<2xf32>
    %7 = vector.multi_reduction <maximumf>, %6, %cst_5 [1] : vector<2x8xf32> to vector<2xf32>
    %8 = vector.shape_cast %7 : vector<2xf32> to vector<2x1xf32>
    %9 = vector.broadcast %8 : vector<2x1xf32> to vector<2x8xf32>
    %10 = arith.subf %6, %9 : vector<2x8xf32>
    %11 = math.exp %10 : vector<2x8xf32>
    %cst_6 = arith.constant dense<0.000000e+00> : vector<2xf32>
    %12 = vector.multi_reduction <add>, %11, %cst_6 [1] : vector<2x8xf32> to vector<2xf32>
    %13 = vector.shape_cast %12 : vector<2xf32> to vector<2x1xf32>
    %14 = vector.broadcast %13 : vector<2x1xf32> to vector<2x8xf32>
    %15 = arith.divf %11, %14 : vector<2x8xf32>
    %c0_7 = arith.constant 0 : index
    %c0_8 = arith.constant 0 : index
    %16 = vector.load %arg3[%c0_7, %c0_8] : memref<2x8xf32, #tpu.memory_space<vmem>>, vector<2x8xf32>
    tpu.vector_store %arg3[%c0_7, %c0_8], %15 {strides = array<i32>} : memref<2x8xf32, #tpu.memory_space<vmem>>, vector<2x8xf32>,
    return
  }
}

</mosaic_0001>

<llo_original>
// kernel: vit_classification_forward.6
$region0: #{vit_classification_forward.6}
  #allocation0 [shape = 'u32[]', space=smem, size = 0x4, offset = 0x4, fixed_abs, tag = 'smem constant byte address 0x4 - core index']
  #allocation1 [shape = 'u32[72,128]{1,0:T(1,128)}', space=vmem, size = 0x9000, scoped, tag = 'internal scratch']
  %s0 = inlined_call_operand.vmem [shape: f32[32,48], index: 0, kind: input, shape index: {}]
  %s1 = inlined_call_operand.vmem [shape: bf16[48,32], index: 1, kind: input, shape index: {}]
  %s2 = inlined_call_operand.vmem [shape: f32[1,32], index: 2, kind: input, shape index: {}]
  %s3 = inlined_call_operand.vmem [shape: f32[16,32], index: 3, kind: input, shape index: {}]
  %s4 = inlined_call_operand.vmem [shape: f32[32,32], index: 4, kind: output, shape index: {}]
  %s5 = sld [smem:[#allocation0]]
  $region49: #{vit_classification_forward.6} parent=0
    _
  %s7 = ssub.s32 1, %s5
  %s8 = scalar_select 0, %s7, %s5
  loop: start=0, step=1, limit=4
  $region2: #{vit_classification_forward.6} parent=0 // loop_pre_header
    _
  $region3: #{vit_classification_forward.6} parent=0 // loop_header
    %s10 = sphi 0, %s14
    %p11 = scmp.ge.s32.totalorder %s10, 4
    %s20 = sphi 0, %s22
    %s23 = sphi 0, %s20
    %s24 = sphi 0, %s23
    %s40 = sphi 0, %s24
    %s44 = sphi 0, %s44
    %s46 = sphi 0, %s44
    %s47 = sphi 0, %s46
    %s61 = sphi 0, %s47
    %s65 = sphi 0, %s65
    %s67 = sphi 0, %s65
    %s68 = sphi 0, %s67
    %s82 = sphi 0, %s68
    %s86 = sphi 0, %s86
    %s88 = sphi 0, %s86
    %s89 = sphi 0, %s88
    %s103 = sphi 0, %s89
    %s109 = sphi 0, %s111
    %s112 = sphi 0, %s109
    %s113 = sphi 0, %s112
    %s129 = sphi 0, %s113
  $region4: #{vit_classification_forward.6} parent=0 // loop_header_branch
    %13 = sbr.rel (%p11) target = $region8
  $region5: #{vit_classification_forward.6} parent=0 // loop_body
    %s15 = ssub.s32 %s10, 1
    %s16 = ssub.s32 %s10, 2
    %s17 = sadd.s32 %s10, 1
    %s18 = ssub.s32 %s10, %s17
    %p19 = scmp.eq.s32.totalorder %s18, 0
    %s21 = sadd.s32 %s20, 1
    %s22 = scalar_select %p19, %s20, %s21
    %p25 = pneg %p19
    %p26 = scmp.eq.s32.totalorder %s10, 1
    %p27 = por %p25, %p26
    %p28 = scmp.ne.s32.totalorder %s20, %s23
    %p29 = scmp.eq.s32.totalorder %s10, 0
    %p30 = por %p28, %p29
    %p31 = scmp.ne.s32.totalorder %s20, %s23
    %p32 = scmp.eq.s32.totalorder %s15, 1
    %p33 = por %p31, %p32
    %p34 = scmp.ne.s32.totalorder %s23, %s24
    %p35 = scmp.eq.s32.totalorder %s15, 0
    %p36 = por %p34, %p35
    %p37 = scmp.ne.s32.totalorder %s23, %s24
    %p38 = scmp.eq.s32.totalorder %s16, 1
    %p39 = por %p37, %p38
    %p41 = scmp.ne.s32.totalorder %s24, %s40
    %p42 = scmp.eq.s32.totalorder %s16, 0
    %p43 = por %p41, %p42
    %s45 = sadd.s32 %s44, 1
    %p48 = scmp.eq.s32.totalorder %s10, 1
    %p49 = scmp.ne.s32.totalorder %s44, %s46
    %p50 = scmp.eq.s32.totalorder %s10, 0
    %p51 = por %p49, %p50
    %p52 = scmp.ne.s32.totalorder %s44, %s46
    %p53 = scmp.eq.s32.totalorder %s15, 1
    %p54 = por %p52, %p53
    %p55 = scmp.ne.s32.totalorder %s46, %s47
    %p56 = scmp.eq.s32.totalorder %s15, 0
    %p57 = por %p55, %p56
    %p58 = scmp.ne.s32.totalorder %s46, %s47
    %p59 = scmp.eq.s32.totalorder %s16, 1
    %p60 = por %p58, %p59
    %p62 = scmp.ne.s32.totalorder %s47, %s61
    %p63 = scmp.eq.s32.totalorder %s16, 0
    %p64 = por %p62, %p63
    %s66 = sadd.s32 %s65, 1
    %p69 = scmp.eq.s32.totalorder %s10, 1
    %p70 = scmp.ne.s32.totalorder %s65, %s67
    %p71 = scmp.eq.s32.totalorder %s10, 0
    %p72 = por %p70, %p71
    %p73 = scmp.ne.s32.totalorder %s65, %s67
    %p74 = scmp.eq.s32.totalorder %s15, 1
    %p75 = por %p73, %p74
    %p76 = scmp.ne.s32.totalorder %s67, %s68
    %p77 = scmp.eq.s32.totalorder %s15, 0
    %p78 = por %p76, %p77
    %p79 = scmp.ne.s32.totalorder %s67, %s68
    %p80 = scmp.eq.s32.totalorder %s16, 1
    %p81 = por %p79, %p80
    %p83 = scmp.ne.s32.totalorder %s68, %s82
    %p84 = scmp.eq.s32.totalorder %s16, 0
    %p85 = por %p83, %p84
    %s87 = sadd.s32 %s86, 1
    %p90 = scmp.eq.s32.totalorder %s10, 1
    %p91 = scmp.ne.s32.totalorder %s86, %s88
    %p92 = scmp.eq.s32.totalorder %s10, 0
    %p93 = por %p91, %p92
    %p94 = scmp.ne.s32.totalorder %s86, %s88
    %p95 = scmp.eq.s32.totalorder %s15, 1
    %p96 = por %p94, %p95
    %p97 = scmp.ne.s32.totalorder %s88, %s89
    %p98 = scmp.eq.s32.totalorder %s15, 0
    %p99 = por %p97, %p98
    %p100 = scmp.ne.s32.totalorder %s88, %s89
    %p101 = scmp.eq.s32.totalorder %s16, 1
    %p102 = por %p100, %p101
    %p104 = scmp.ne.s32.totalorder %s89, %s103
    %p105 = scmp.eq.s32.totalorder %s16, 0
    %p106 = por %p104, %p105
    %s107 = ssub.s32 %s10, %s17
    %p108 = scmp.eq.s32.totalorder %s107, 0
    %s110 = sadd.s32 %s109, 1
    %s111 = scalar_select %p108, %s109, %s110
    %p114 = pneg %p108
    %p115 = scmp.eq.s32.totalorder %s10, 1
    %p116 = por %p114, %p115
    %p117 = scmp.ne.s32.totalorder %s109, %s112
    %p118 = scmp.eq.s32.totalorder %s10, 0
    %p119 = por %p117, %p118
    %p120 = scmp.ne.s32.totalorder %s109, %s112
    %p121 = scmp.eq.s32.totalorder %s15, 1
    %p122 = por %p120, %p121
    %p123 = scmp.ne.s32.totalorder %s112, %s113
    %p124 = scmp.eq.s32.totalorder %s15, 0
    %p125 = por %p123, %p124
    %p126 = scmp.ne.s32.totalorder %s112, %s113
    %p127 = scmp.eq.s32.totalorder %s16, 1
    %p128 = por %p126, %p127
    %p130 = scmp.ne.s32.totalorder %s113, %s129
    %p131 = scmp.eq.s32.totalorder %s16, 0
    %p132 = por %p130, %p131
    %p133 = scmp.le.s32.totalorder 1, %s10
    %p134 = scmp.lt.s32.totalorder %s10, 3
    %p135 = pnand %p133, %p134
    %p136 = pneg %p135
    // Predicated region
    $region9: #{vit_classification_forward.6} parent=5 // pred_check
      _
    $region10: #{vit_classification_forward.6} parent=5 // pred_check_branch
      %138 = sbr.rel (%p135) target = $region12
    $region11: #{vit_classification_forward.6} parent=5 // pred_region
      %s139 = ssub.s32 %s10, 1
      // Predicated region
      $region13: #{vit_classification_forward.6} parent=11 // pred_check
        %p140 = pneg %p57
      $region14: #{vit_classification_forward.6} parent=11 // pred_check_branch
        %142 = sbr.rel (%p140) target = $region16
      $region15: #{vit_classification_forward.6} parent=11 // pred_region
        _
      $region16: #{vit_classification_forward.6} parent=11 // pred_fallthru
        _
      // Predicated region
      $region17: #{vit_classification_forward.6} parent=11 // pred_check
        %p143 = pneg %p78
      $region18: #{vit_classification_forward.6} parent=11 // pred_check_branch
        %145 = sbr.rel (%p143) target = $region20
      $region19: #{vit_classification_forward.6} parent=11 // pred_region
        _
      $region20: #{vit_classification_forward.6} parent=11 // pred_fallthru
        _
      // Predicated region
      $region21: #{vit_classification_forward.6} parent=11 // pred_check
        %p146 = pneg %p99
      $region22: #{vit_classification_forward.6} parent=11 // pred_check_branch
        %148 = sbr.rel (%p146) target = $region24
      $region23: #{vit_classification_forward.6} parent=11 // pred_region
        _
      $region24: #{vit_classification_forward.6} parent=11 // pred_fallthru
        _
    $region12: #{vit_classification_forward.6} parent=5 // pred_fallthru
      _
    %p149 = scmp.lt.s32.totalorder %s10, 2
    // Predicated region
    $region25: #{vit_classification_forward.6} parent=5 // pred_check
      %p150 = pneg %p149
    $region26: #{vit_classification_forward.6} parent=5 // pred_check_branch
      %152 = sbr.rel (%p150) target = $region28
    $region27: #{vit_classification_forward.6} parent=5 // pred_region
      // Predicated region
      $region29: #{vit_classification_forward.6} parent=27 // pred_check
        %p153 = pneg %p30
      $region30: #{vit_classification_forward.6} parent=27 // pred_check_branch
        %155 = sbr.rel (%p153) target = $region32
      $region31: #{vit_classification_forward.6} parent=27 // pred_region
        %s156 = smul.u32 2, %s10
        %p157 = scmp.lt.s32.totalorder %s156, 3
        %s158 = scalar_select %p157, %s156, 3
        %s159 = smul.addr %s158, 8
        %s160 = scalar_lea.vmem %s0, %s159
        %s161 = smul.u32 2, %s10
      $region32: #{vit_classification_forward.6} parent=27 // pred_fallthru
        _
    $region28: #{vit_classification_forward.6} parent=5 // pred_fallthru
      _
    %p162 = scmp.le.s32.totalorder 1, %s10
    %p163 = scmp.lt.s32.totalorder %s10, 3
    %p164 = pnand %p162, %p163
    %p165 = pneg %p164
    // Predicated region
    $region33: #{vit_classification_forward.6} parent=5 // pred_check
      _
    $region34: #{vit_classification_forward.6} parent=5 // pred_check_branch
      %167 = sbr.rel (%p164) target = $region36
    $region35: #{vit_classification_forward.6} parent=5 // pred_region
      %s168 = ssub.s32 %s10, 1
      %s169 = smul.u32 2, %s15
      %p170 = scmp.lt.s32.totalorder %s169, 3
      %s171 = scalar_select %p170, %s169, 3
      %s172 = smul.addr %s171, 8
      %s173 = scalar_lea.vmem %s0, %s172
      %p174 = pneg %p36
      %p175 = pneg %p33
      %p176 = pneg %p57
      %p177 = pneg %p54
      %p178 = pneg %p78
      %p179 = pneg %p75
      %p180 = pneg %p99
      %p181 = pneg %p96
      %p182 = pneg %p125
      %p183 = pneg %p122
      %s184 = smul.u32 2, %s15
      %p185 = scmp.lt.s32.totalorder %s184, 3
      %s186 = scalar_select %p185, %s184, 3
      %s187 = smul.addr %s186, 8
      %s188 = scalar_lea.vmem %s4, %s187
      %s189 = smul.u32 2, %s15
      %p190 = scmp.lt.s32.totalorder %s189, 3
      %s191 = scalar_select %p190, %s189, 3
      %s192 = smul.addr %s191, 8
      %s193 = scalar_lea.vmem %s0, %s192
      %s194 = smul.u32 2, %s15
      %s195 = smul.u32 2, %s15
      %p196 = scmp.lt.s32.totalorder %s195, 3
      %s197 = scalar_select %p196, %s195, 3
      %s198 = smul.addr %s197, 8
      %s199 = scalar_lea.vmem %s4, %s198
      %s200 = smul.u32 2, %s15
      %v202 = vld [vmem:[%s193] sm:$0xff]
      %v203 = vld [vmem:[%s193 + $0x8] sm:$0xff]
      %v204 = vpack.c.bf16 %v203, %v202
      %v205 = vld [vmem:[%s1] sm:$0xf]
      %v206 = vld [vmem:[%s1 + $0x4] sm:$0xf]
      %v207 = vld [vmem:[%s1 + $0x8] sm:$0xf]
      %v208 = vld [vmem:[%s1 + $0xc] sm:$0xf]
      %v209 = vld [vmem:[%s1 + $0x10] sm:$0xf]
      %v210 = vld [vmem:[%s1 + $0x14] sm:$0xf]
      %v211 = vld [vmem:[%s2] sm:$0x1]
      %v213 = vperm.slane %v211, 0
      %v221 = vunpack.c.l.b16 %v205
      %v222 = vunpack.c.l.b16 %v206
      %v223 = vunpack.c.l.b16 %v207
      %v224 = vunpack.c.l.b16 %v208
      %v225 = vunpack.c.l.b16 %v209
      %v226 = vunpack.c.l.b16 %v210
      %v227 = vpack.c.b16 %v222, %v221
      %v228 = vpack.c.b16 %v224, %v223
      %v229 = vpack.c.b16 %v226, %v225
      %vm233 = vcmask 392192
      %v235 = vsel %vm233, %v204, 0
      %237 = vmatpush.bf16.msra.mxu0 0
      %238 = vmatpush.bf16.msra.mxu0 0
      %239 = vmatpush.bf16.msra.mxu0 0
      %240 = vmatpush.bf16.msra.mxu0 0
      %241 = vmatpush.bf16.msra.mxu0 0
      %242 = vmatpush.bf16.msra.mxu0 %v229
      %243 = vmatpush.bf16.msra.mxu0 %v228
      %244 = vmatpush.bf16.msra.mxu0 %v227
      %245 = vmatmul.bf16.gmra.mxu0 %v235
      %v246 = vpop.f32.mrf.mxu0
      %v247 = vadd.f32 %v213, %v246
      %v248 = vpop.f32.mrf.mxu0
      %v249 = vadd.f32 %v213, %v248
      %250 = vdwg.mxu0
      %v251 = vld [vmem:[%s3] sm:$0xff]
      %v252 = vld [vmem:[%s3 + $0x8] sm:$0xff]
      %v253 = vadd.f32 %v247, %v251
      %v254 = vadd.f32 %v249, %v252
      %vm255 = vcmask 261120
      %256 = vst.msk [vmem:[%s199] sm:$0xff] %vm255, %v253
      %257 = vst.msk [vmem:[%s199 + $0x8] sm:$0xff] %vm255, %v254
      %s258 = smul.u32 2, %s15
      %p259 = scmp.lt.s32.totalorder %s258, 3
      %s260 = scalar_select %p259, %s258, 3
      %s261 = smul.addr %s260, 8
      %s262 = scalar_lea.vmem %s4, %s261
      // Predicated region
      $region37: #{vit_classification_forward.6} parent=35 // pred_check
        %p263 = pneg %p122
      $region38: #{vit_classification_forward.6} parent=35 // pred_check_branch
        %265 = sbr.rel (%p263) target = $region40
      $region39: #{vit_classification_forward.6} parent=35 // pred_region
        %s266 = smul.u32 2, %s15
      $region40: #{vit_classification_forward.6} parent=35 // pred_fallthru
        _
    $region36: #{vit_classification_forward.6} parent=5 // pred_fallthru
      _
    %p267 = scmp.le.s32.totalorder 2, %s10
    // Predicated region
    $region41: #{vit_classification_forward.6} parent=5 // pred_check
      %p268 = pneg %p267
    $region42: #{vit_classification_forward.6} parent=5 // pred_check_branch
      %270 = sbr.rel (%p268) target = $region44
    $region43: #{vit_classification_forward.6} parent=5 // pred_region
      %s271 = ssub.s32 %s10, 2
      // Predicated region
      $region45: #{vit_classification_forward.6} parent=43 // pred_check
        %p272 = pneg %p128
      $region46: #{vit_classification_forward.6} parent=43 // pred_check_branch
        %274 = sbr.rel (%p272) target = $region48
      $region47: #{vit_classification_forward.6} parent=43 // pred_region
        %s275 = smul.u32 2, %s16
        %p276 = scmp.lt.s32.totalorder %s275, 3
        %s277 = scalar_select %p276, %s275, 3
        %s278 = smul.addr %s277, 8
        %s279 = scalar_lea.vmem %s4, %s278
      $region48: #{vit_classification_forward.6} parent=43 // pred_fallthru
        _
    $region44: #{vit_classification_forward.6} parent=5 // pred_fallthru
      _
  $region6: #{vit_classification_forward.6} parent=0 // loop_footer
    %s14 = sadd.s32 1, %s10
  $region7: #{vit_classification_forward.6} parent=0 // loop_footer_branch
    %9 = sbr.rel target = $region3
  $region8: #{vit_classification_forward.6} parent=0 // loop_exit
    _

// kernel: vit_classification_forward.11
$region0: #{vit_classification_forward.11}
  #allocation0 [shape = 'u32[]', space=smem, size = 0x4, offset = 0x4, fixed_abs, tag = 'smem constant byte address 0x4 - core index']
  #allocation1 [shape = 'u32[72,128]{1,0:T(1,128)}', space=vmem, size = 0x9000, scoped, tag = 'internal scratch']
  %s0 = inlined_call_operand.vmem [shape: f32[2,32], index: 0, kind: input, shape index: {}]
  %s1 = inlined_call_operand.vmem [shape: bf16[32,8], index: 1, kind: input, shape index: {}]
  %s2 = inlined_call_operand.vmem [shape: f32[1,8], index: 2, kind: input, shape index: {}]
  %s3 = inlined_call_operand.hbm [shape: f32[2,8], index: 3, kind: output, shape index: {}]
  %s4 = sld [smem:[#allocation0]]
  $region22: #{vit_classification_forward.11} parent=0
    _
  %s6 = ssub.s32 1, %s4
  %s7 = scalar_select 0, %s6, %s4
  $region1: #{vit_classification_forward.11} parent=0
    #allocation2 [shape = 'u8[1024]{0}', space=vmem, size = 0x400, scoped, tag = 'output window, operand 0, single buffered']
    #allocation3 [shape = 's32[1]{0}', space=sflag, size = 0x4, scoped, tag = 'scoped memory for vit_classification_forward.11']
    %8 = vsyncpa [#allocation3], 0
    // Predicated region
    $region2: #{vit_classification_forward.11} parent=1 // pred_check
      _
    $region3: #{vit_classification_forward.11} parent=1 // pred_check_branch
      %10 = sbr.rel (0) target = $region5
    $region4: #{vit_classification_forward.11} parent=1 // pred_region
      _
    $region5: #{vit_classification_forward.11} parent=1 // pred_fallthru
      _
    // Predicated region
    $region6: #{vit_classification_forward.11} parent=1 // pred_check
      _
    $region7: #{vit_classification_forward.11} parent=1 // pred_check_branch
      %12 = sbr.rel (0) target = $region9
    $region8: #{vit_classification_forward.11} parent=1 // pred_region
      _
    $region9: #{vit_classification_forward.11} parent=1 // pred_fallthru
      _
    // Predicated region
    $region10: #{vit_classification_forward.11} parent=1 // pred_check
      _
    $region11: #{vit_classification_forward.11} parent=1 // pred_check_branch
      %14 = sbr.rel (0) target = $region13
    $region12: #{vit_classification_forward.11} parent=1 // pred_region
      _
    $region13: #{vit_classification_forward.11} parent=1 // pred_fallthru
      _
    %v16 = vld [vmem:[%s0] sm:$0x3]
    %v17 = vpack.c.bf16 %v16, %v16
    %v18 = vld [vmem:[%s1] sm:$0xf]
    %v19 = vld [vmem:[%s1 + $0x4] sm:$0xf]
    %v20 = vld [vmem:[%s1 + $0x8] sm:$0xf]
    %v21 = vld [vmem:[%s1 + $0xc] sm:$0xf]
    %v22 = vld [vmem:[%s2] sm:$0x1]
    %v24 = vperm.slane %v22, 0
    %v30 = vunpack.c.l.b16 %v18
    %v31 = vunpack.c.l.b16 %v19
    %v32 = vunpack.c.l.b16 %v20
    %v33 = vunpack.c.l.b16 %v21
    %v34 = vpack.c.b16 %v31, %v30
    %v35 = vpack.c.b16 %v33, %v32
    %vm38 = vcmask 261120
    %v40 = vsel %vm38, %v17, 0
    %42 = vmatpush.bf16.msra.mxu0 0
    %43 = vmatpush.bf16.msra.mxu0 0
    %44 = vmatpush.bf16.msra.mxu0 0
    %45 = vmatpush.bf16.msra.mxu0 0
    %46 = vmatpush.bf16.msra.mxu0 0
    %47 = vmatpush.bf16.msra.mxu0 0
    %48 = vmatpush.bf16.msra.mxu0 %v35
    %49 = vmatpush.bf16.msra.mxu0 %v34
    %50 = vmatmul.bf16.gmra.mxu0 %v40
    %v51 = vpop.f32.mrf.mxu0
    %v52 = vadd.f32 %v24, %v51
    %v53 = vpop.f32.mrf.mxu0
    %54 = vdwg.mxu0
    %vm55 = vcmask 58368
    %v56 = vsel %vm55, %v52, -inf
    %57 = vmax.xlane.f32.xlu0 %v56
    %v58 = vpop.xlane.xlu0 %57
    %v59 = vsub.f32 %v52, %v58
    %v60 = vmul.f32 %v59, 1.442695
    %v61 = vpow.pop %v60
    %v62 = vsel %vm55, %v61, 0.0
    %63 = vadd.xlane.f32.xlu0 %v62
    %v64 = vpop.xlane.xlu0 %63
    %v65 = vrcp.pop %v64
    %v66 = vmul.f32 %v64, %v65
    %v67 = vsub.f32 1.0, %v66
    %v68 = vmul.f32 %v65, %v67
    %v69 = vadd.f32 %v65, %v68
    %vm70 = vweird.f32 %v64
    %vm71 = vweird.f32 %v65
    %vm72 = vmor %vm70, %vm71
    %v73 = vsel %vm72, %v65, %v69
    %v74 = vand.u32 2147483647, %v64
    %vm75 = vcmp.eq.f32.partialorder %v74, 8.507059e+37
    %v76 = vand.u32 %v64, 2147483648
    %v77 = vor.u32 1.1754944e-38, %v76
    %v78 = vsel %vm75, %v77, %v73
    %v79 = vmul.f32 %v61, %v78
    %80 = vst.msk [vmem:[#allocation2] sm:$0x3] %vm55, %v79
    // Predicated region
    $region14: #{vit_classification_forward.11} parent=1 // pred_check
      _
    $region15: #{vit_classification_forward.11} parent=1 // pred_check_branch
      %82 = sbr.rel (0) target = $region17
    $region16: #{vit_classification_forward.11} parent=1 // pred_region
      %84 = vsyncadd [#allocation3], 0
      %s86 = sshll.u32 [#allocation2], 4
      %s87 = int_to_ptr.vmem [resolvable:$true] %s86
      %s88 = sshll.u32 %s3, 4
      %s89 = int_to_ptr.hbm [resolvable:$true] %s88
      %91 = dma.vmem_to_hbm [thread:$0]  %s87, 32, %s89, [#allocation3]
    $region17: #{vit_classification_forward.11} parent=1 // pred_fallthru
      _
    // Predicated region
    $region18: #{vit_classification_forward.11} parent=1 // pred_check
      _
    $region19: #{vit_classification_forward.11} parent=1 // pred_check_branch
      %93 = sbr.rel (0) target = $region21
    $region20: #{vit_classification_forward.11} parent=1 // pred_region
      %95 = dma.done [#allocation3], 32
    $region21: #{vit_classification_forward.11} parent=1 // pred_fallthru
      _
    %96 = vsyncpa [#allocation3], 1

// kernel: vit_classification_forward.8
$region0: #{vit_classification_forward.8}
  #allocation0 [shape = 'u32[]', space=smem, size = 0x4, offset = 0x4, fixed_abs, tag = 'smem constant byte address 0x4 - core index']
  #allocation1 [shape = 'u32[72,128]{1,0:T(1,128)}', space=vmem, size = 0x9000, scoped, tag = 'internal scratch']
  %s0 = inlined_call_operand.vmem [shape: f32[48,32], index: 0, kind: input, shape index: {}]
  %s1 = inlined_call_operand.vmem [shape: f32[1,32], index: 1, kind: input, shape index: {}]
  %s2 = inlined_call_operand.vmem [shape: f32[1,32], index: 2, kind: input, shape index: {}]
  %s3 = inlined_call_operand.vmem [shape: bf16[32,64], index: 3, kind: input, shape index: {}]
  %s4 = inlined_call_operand.vmem [shape: f32[1,64], index: 4, kind: input, shape index: {}]
  %s5 = inlined_call_operand.vmem [shape: bf16[64,32], index: 5, kind: input, shape index: {}]
  %s6 = inlined_call_operand.vmem [shape: f32[1,32], index: 6, kind: input, shape index: {}]
  %s7 = inlined_call_operand.vmem [shape: f32[48,32], index: 7, kind: output, shape index: {}]
  %s8 = sld [smem:[#allocation0]]
  $region61: #{vit_classification_forward.8} parent=0
    _
  %s10 = ssub.s32 1, %s8
  %s11 = scalar_select 0, %s10, %s8
  loop: start=0, step=1, limit=4
  $region2: #{vit_classification_forward.8} parent=0 // loop_pre_header
    _
  $region3: #{vit_classification_forward.8} parent=0 // loop_header
    %s13 = sphi 0, %s17
    %p14 = scmp.ge.s32.totalorder %s13, 4
    %s23 = sphi 0, %s25
    %s26 = sphi 0, %s23
    %s27 = sphi 0, %s26
    %s43 = sphi 0, %s27
    %s47 = sphi 0, %s47
    %s49 = sphi 0, %s47
    %s50 = sphi 0, %s49
    %s64 = sphi 0, %s50
    %s68 = sphi 0, %s68
    %s70 = sphi 0, %s68
    %s71 = sphi 0, %s70
    %s85 = sphi 0, %s71
    %s89 = sphi 0, %s89
    %s91 = sphi 0, %s89
    %s92 = sphi 0, %s91
    %s106 = sphi 0, %s92
    %s110 = sphi 0, %s110
    %s112 = sphi 0, %s110
    %s113 = sphi 0, %s112
    %s127 = sphi 0, %s113
    %s131 = sphi 0, %s131
    %s133 = sphi 0, %s131
    %s134 = sphi 0, %s133
    %s148 = sphi 0, %s134
    %s152 = sphi 0, %s152
    %s154 = sphi 0, %s152
    %s155 = sphi 0, %s154
    %s169 = sphi 0, %s155
    %s175 = sphi 0, %s177
    %s178 = sphi 0, %s175
    %s179 = sphi 0, %s178
    %s195 = sphi 0, %s179
  $region4: #{vit_classification_forward.8} parent=0 // loop_header_branch
    %16 = sbr.rel (%p14) target = $region8
  $region5: #{vit_classification_forward.8} parent=0 // loop_body
    %s18 = ssub.s32 %s13, 1
    %s19 = ssub.s32 %s13, 2
    %s20 = sadd.s32 %s13, 1
    %s21 = ssub.s32 %s13, %s20
    %p22 = scmp.eq.s32.totalorder %s21, 0
    %s24 = sadd.s32 %s23, 1
    %s25 = scalar_select %p22, %s23, %s24
    %p28 = pneg %p22
    %p29 = scmp.eq.s32.totalorder %s13, 1
    %p30 = por %p28, %p29
    %p31 = scmp.ne.s32.totalorder %s23, %s26
    %p32 = scmp.eq.s32.totalorder %s13, 0
    %p33 = por %p31, %p32
    %p34 = scmp.ne.s32.totalorder %s23, %s26
    %p35 = scmp.eq.s32.totalorder %s18, 1
    %p36 = por %p34, %p35
    %p37 = scmp.ne.s32.totalorder %s26, %s27
    %p38 = scmp.eq.s32.totalorder %s18, 0
    %p39 = por %p37, %p38
    %p40 = scmp.ne.s32.totalorder %s26, %s27
    %p41 = scmp.eq.s32.totalorder %s19, 1
    %p42 = por %p40, %p41
    %p44 = scmp.ne.s32.totalorder %s27, %s43
    %p45 = scmp.eq.s32.totalorder %s19, 0
    %p46 = por %p44, %p45
    %s48 = sadd.s32 %s47, 1
    %p51 = scmp.eq.s32.totalorder %s13, 1
    %p52 = scmp.ne.s32.totalorder %s47, %s49
    %p53 = scmp.eq.s32.totalorder %s13, 0
    %p54 = por %p52, %p53
    %p55 = scmp.ne.s32.totalorder %s47, %s49
    %p56 = scmp.eq.s32.totalorder %s18, 1
    %p57 = por %p55, %p56
    %p58 = scmp.ne.s32.totalorder %s49, %s50
    %p59 = scmp.eq.s32.totalorder %s18, 0
    %p60 = por %p58, %p59
    %p61 = scmp.ne.s32.totalorder %s49, %s50
    %p62 = scmp.eq.s32.totalorder %s19, 1
    %p63 = por %p61, %p62
    %p65 = scmp.ne.s32.totalorder %s50, %s64
    %p66 = scmp.eq.s32.totalorder %s19, 0
    %p67 = por %p65, %p66
    %s69 = sadd.s32 %s68, 1
    %p72 = scmp.eq.s32.totalorder %s13, 1
    %p73 = scmp.ne.s32.totalorder %s68, %s70
    %p74 = scmp.eq.s32.totalorder %s13, 0
    %p75 = por %p73, %p74
    %p76 = scmp.ne.s32.totalorder %s68, %s70
    %p77 = scmp.eq.s32.totalorder %s18, 1
    %p78 = por %p76, %p77
    %p79 = scmp.ne.s32.totalorder %s70, %s71
    %p80 = scmp.eq.s32.totalorder %s18, 0
    %p81 = por %p79, %p80
    %p82 = scmp.ne.s32.totalorder %s70, %s71
    %p83 = scmp.eq.s32.totalorder %s19, 1
    %p84 = por %p82, %p83
    %p86 = scmp.ne.s32.totalorder %s71, %s85
    %p87 = scmp.eq.s32.totalorder %s19, 0
    %p88 = por %p86, %p87
    %s90 = sadd.s32 %s89, 1
    %p93 = scmp.eq.s32.totalorder %s13, 1
    %p94 = scmp.ne.s32.totalorder %s89, %s91
    %p95 = scmp.eq.s32.totalorder %s13, 0
    %p96 = por %p94, %p95
    %p97 = scmp.ne.s32.totalorder %s89, %s91
    %p98 = scmp.eq.s32.totalorder %s18, 1
    %p99 = por %p97, %p98
    %p100 = scmp.ne.s32.totalorder %s91, %s92
    %p101 = scmp.eq.s32.totalorder %s18, 0
    %p102 = por %p100, %p101
    %p103 = scmp.ne.s32.totalorder %s91, %s92
    %p104 = scmp.eq.s32.totalorder %s19, 1
    %p105 = por %p103, %p104
    %p107 = scmp.ne.s32.totalorder %s92, %s106
    %p108 = scmp.eq.s32.totalorder %s19, 0
    %p109 = por %p107, %p108
    %s111 = sadd.s32 %s110, 1
    %p114 = scmp.eq.s32.totalorder %s13, 1
    %p115 = scmp.ne.s32.totalorder %s110, %s112
    %p116 = scmp.eq.s32.totalorder %s13, 0
    %p117 = por %p115, %p116
    %p118 = scmp.ne.s32.totalorder %s110, %s112
    %p119 = scmp.eq.s32.totalorder %s18, 1
    %p120 = por %p118, %p119
    %p121 = scmp.ne.s32.totalorder %s112, %s113
    %p122 = scmp.eq.s32.totalorder %s18, 0
    %p123 = por %p121, %p122
    %p124 = scmp.ne.s32.totalorder %s112, %s113
    %p125 = scmp.eq.s32.totalorder %s19, 1
    %p126 = por %p124, %p125
    %p128 = scmp.ne.s32.totalorder %s113, %s127
    %p129 = scmp.eq.s32.totalorder %s19, 0
    %p130 = por %p128, %p129
    %s132 = sadd.s32 %s131, 1
    %p135 = scmp.eq.s32.totalorder %s13, 1
    %p136 = scmp.ne.s32.totalorder %s131, %s133
    %p137 = scmp.eq.s32.totalorder %s13, 0
    %p138 = por %p136, %p137
    %p139 = scmp.ne.s32.totalorder %s131, %s133
    %p140 = scmp.eq.s32.totalorder %s18, 1
    %p141 = por %p139, %p140
    %p142 = scmp.ne.s32.totalorder %s133, %s134
    %p143 = scmp.eq.s32.totalorder %s18, 0
    %p144 = por %p142, %p143
    %p145 = scmp.ne.s32.totalorder %s133, %s134
    %p146 = scmp.eq.s32.totalorder %s19, 1
    %p147 = por %p145, %p146
    %p149 = scmp.ne.s32.totalorder %s134, %s148
    %p150 = scmp.eq.s32.totalorder %s19, 0
    %p151 = por %p149, %p150
    %s153 = sadd.s32 %s152, 1
    %p156 = scmp.eq.s32.totalorder %s13, 1
    %p157 = scmp.ne.s32.totalorder %s152, %s154
    %p158 = scmp.eq.s32.totalorder %s13, 0
    %p159 = por %p157, %p158
    %p160 = scmp.ne.s32.totalorder %s152, %s154
    %p161 = scmp.eq.s32.totalorder %s18, 1
    %p162 = por %p160, %p161
    %p163 = scmp.ne.s32.totalorder %s154, %s155
    %p164 = scmp.eq.s32.totalorder %s18, 0
    %p165 = por %p163, %p164
    %p166 = scmp.ne.s32.totalorder %s154, %s155
    %p167 = scmp.eq.s32.totalorder %s19, 1
    %p168 = por %p166, %p167
    %p170 = scmp.ne.s32.totalorder %s155, %s169
    %p171 = scmp.eq.s32.totalorder %s19, 0
    %p172 = por %p170, %p171
    %s173 = ssub.s32 %s13, %s20
    %p174 = scmp.eq.s32.totalorder %s173, 0
    %s176 = sadd.s32 %s175, 1
    %s177 = scalar_select %p174, %s175, %s176
    %p180 = pneg %p174
    %p181 = scmp.eq.s32.totalorder %s13, 1
    %p182 = por %p180, %p181
    %p183 = scmp.ne.s32.totalorder %s175, %s178
    %p184 = scmp.eq.s32.totalorder %s13, 0
    %p185 = por %p183, %p184
    %p186 = scmp.ne.s32.totalorder %s175, %s178
    %p187 = scmp.eq.s32.totalorder %s18, 1
    %p188 = por %p186, %p187
    %p189 = scmp.ne.s32.totalorder %s178, %s179
    %p190 = scmp.eq.s32.totalorder %s18, 0
    %p191 = por %p189, %p190
    %p192 = scmp.ne.s32.totalorder %s178, %s179
    %p193 = scmp.eq.s32.totalorder %s19, 1
    %p194 = por %p192, %p193
    %p196 = scmp.ne.s32.totalorder %s179, %s195
    %p197 = scmp.eq.s32.totalorder %s19, 0
    %p198 = por %p196, %p197
    %p199 = scmp.le.s32.totalorder 1, %s13
    %p200 = scmp.lt.s32.totalorder %s13, 3
    %p201 = pnand %p199, %p200
    %p202 = pneg %p201
    // Predicated region
    $region9: #{vit_classification_forward.8} parent=5 // pred_check
      _
    $region10: #{vit_classification_forward.8} parent=5 // pred_check_branch
      %204 = sbr.rel (%p201) target = $region12
    $region11: #{vit_classification_forward.8} parent=5 // pred_region
      %s205 = ssub.s32 %s13, 1
      // Predicated region
      $region13: #{vit_classification_forward.8} parent=11 // pred_check
        %p206 = pneg %p60
      $region14: #{vit_classification_forward.8} parent=11 // pred_check_branch
        %208 = sbr.rel (%p206) target = $region16
      $region15: #{vit_classification_forward.8} parent=11 // pred_region
        _
      $region16: #{vit_classification_forward.8} parent=11 // pred_fallthru
        _
      // Predicated region
      $region17: #{vit_classification_forward.8} parent=11 // pred_check
        %p209 = pneg %p81
      $region18: #{vit_classification_forward.8} parent=11 // pred_check_branch
        %211 = sbr.rel (%p209) target = $region20
      $region19: #{vit_classification_forward.8} parent=11 // pred_region
        _
      $region20: #{vit_classification_forward.8} parent=11 // pred_fallthru
        _
      // Predicated region
      $region21: #{vit_classification_forward.8} parent=11 // pred_check
        %p212 = pneg %p102
      $region22: #{vit_classification_forward.8} parent=11 // pred_check_branch
        %214 = sbr.rel (%p212) target = $region24
      $region23: #{vit_classification_forward.8} parent=11 // pred_region
        _
      $region24: #{vit_classification_forward.8} parent=11 // pred_fallthru
        _
      // Predicated region
      $region25: #{vit_classification_forward.8} parent=11 // pred_check
        %p215 = pneg %p123
      $region26: #{vit_classification_forward.8} parent=11 // pred_check_branch
        %217 = sbr.rel (%p215) target = $region28
      $region27: #{vit_classification_forward.8} parent=11 // pred_region
        _
      $region28: #{vit_classification_forward.8} parent=11 // pred_fallthru
        _
      // Predicated region
      $region29: #{vit_classification_forward.8} parent=11 // pred_check
        %p218 = pneg %p144
      $region30: #{vit_classification_forward.8} parent=11 // pred_check_branch
        %220 = sbr.rel (%p218) target = $region32
      $region31: #{vit_classification_forward.8} parent=11 // pred_region
        _
      $region32: #{vit_classification_forward.8} parent=11 // pred_fallthru
        _
      // Predicated region
      $region33: #{vit_classification_forward.8} parent=11 // pred_check
        %p221 = pneg %p165
      $region34: #{vit_classification_forward.8} parent=11 // pred_check_branch
        %223 = sbr.rel (%p221) target = $region36
      $region35: #{vit_classification_forward.8} parent=11 // pred_region
        _
      $region36: #{vit_classification_forward.8} parent=11 // pred_fallthru
        _
    $region12: #{vit_classification_forward.8} parent=5 // pred_fallthru
      _
    %p224 = scmp.lt.s32.totalorder %s13, 2
    // Predicated region
    $region37: #{vit_classification_forward.8} parent=5 // pred_check
      %p225 = pneg %p224
    $region38: #{vit_classification_forward.8} parent=5 // pred_check_branch
      %227 = sbr.rel (%p225) target = $region40
    $region39: #{vit_classification_forward.8} parent=5 // pred_region
      // Predicated region
      $region41: #{vit_classification_forward.8} parent=39 // pred_check
        %p228 = pneg %p33
      $region42: #{vit_classification_forward.8} parent=39 // pred_check_branch
        %230 = sbr.rel (%p228) target = $region44
      $region43: #{vit_classification_forward.8} parent=39 // pred_region
        %s231 = smul.u32 3, %s13
        %p232 = scmp.lt.s32.totalorder %s231, 5
        %s233 = scalar_select %p232, %s231, 5
        %s234 = smul.addr %s233, 8
        %s235 = scalar_lea.vmem %s0, %s234
        %s236 = smul.u32 3, %s13
      $region44: #{vit_classification_forward.8} parent=39 // pred_fallthru
        _
    $region40: #{vit_classification_forward.8} parent=5 // pred_fallthru
      _
    %p237 = scmp.le.s32.totalorder 1, %s13
    %p238 = scmp.lt.s32.totalorder %s13, 3
    %p239 = pnand %p237, %p238
    %p240 = pneg %p239
    // Predicated region
    $region45: #{vit_classification_forward.8} parent=5 // pred_check
      _
    $region46: #{vit_classification_forward.8} parent=5 // pred_check_branch
      %242 = sbr.rel (%p239) target = $region48
    $region47: #{vit_classification_forward.8} parent=5 // pred_region
      %s243 = ssub.s32 %s13, 1
      %s244 = smul.u32 3, %s18
      %p245 = scmp.lt.s32.totalorder %s244, 5
      %s246 = scalar_select %p245, %s244, 5
      %s247 = smul.addr %s246, 8
      %s248 = scalar_lea.vmem %s0, %s247
      %p249 = pneg %p39
      %p250 = pneg %p36
      %p251 = pneg %p60
      %p252 = pneg %p57
      %p253 = pneg %p81
      %p254 = pneg %p78
      %p255 = pneg %p102
      %p256 = pneg %p99
      %p257 = pneg %p123
      %p258 = pneg %p120
      %p259 = pneg %p144
      %p260 = pneg %p141
      %p261 = pneg %p165
      %p262 = pneg %p162
      %p263 = pneg %p191
      %p264 = pneg %p188
      %s265 = smul.u32 3, %s18
      %p266 = scmp.lt.s32.totalorder %s265, 5
      %s267 = scalar_select %p266, %s265, 5
      %s268 = smul.addr %s267, 8
      %s269 = scalar_lea.vmem %s7, %s268
      %s270 = smul.u32 3, %s18
      %p271 = scmp.lt.s32.totalorder %s270, 5
      %s272 = scalar_select %p271, %s270, 5
      %s273 = smul.addr %s272, 8
      %s274 = scalar_lea.vmem %s0, %s273
      %s275 = smul.u32 3, %s18
      %s276 = smul.u32 3, %s18
      %p277 = scmp.lt.s32.totalorder %s276, 5
      %s278 = scalar_select %p277, %s276, 5
      %s279 = smul.addr %s278, 8
      %s280 = scalar_lea.vmem %s7, %s279
      %s281 = smul.u32 3, %s18
      %v283 = vld [vmem:[%s274] sm:$0xff]
      %v284 = vld [vmem:[%s274 + $0x8] sm:$0xff]
      %v285 = vld [vmem:[%s274 + $0x10] sm:$0xff]
      %vm286 = vcmask 261120
      %v287 = vsel %vm286, %v283, 0.0
      %288 = vadd.xlane.f32.xlu0 %v287
      %v289 = vpop.xlane.xlu0 %288
      %v290 = vsel %vm286, %v284, 0.0
      %291 = vadd.xlane.f32.xlu0 %v290
      %v292 = vpop.xlane.xlu0 %291
      %v293 = vsel %vm286, %v285, 0.0
      %294 = vadd.xlane.f32.xlu0 %v293
      %v295 = vpop.xlane.xlu0 %294
      %v296 = vrcp.pop 32.0
      %v297 = vmul.f32 32.0, %v296
      %v298 = vsub.f32 1.0, %v297
      %v299 = vmul.f32 %v296, %v298
      %v300 = vadd.f32 %v296, %v299
      %vm301 = vweird.f32 %v296
      %v302 = vsel %vm301, %v296, %v300
      %v303 = vmul.f32 %v289, %v302
      %v304 = vmul.f32 %v292, %v302
      %v305 = vmul.f32 %v295, %v302
      %v306 = vsub.f32 %v283, %v303
      %v307 = vsub.f32 %v284, %v304
      %v308 = vsub.f32 %v285, %v305
      %v309 = vmul.f32 %v306, %v306
      %v310 = vmul.f32 %v307, %v307
      %v311 = vmul.f32 %v308, %v308
      %v312 = vsel %vm286, %v309, 0.0
      %313 = vadd.xlane.f32.xlu0 %v312
      %v314 = vpop.xlane.xlu0 %313
      %v315 = vsel %vm286, %v310, 0.0
      %316 = vadd.xlane.f32.xlu0 %v315
      %v317 = vpop.xlane.xlu0 %316
      %v318 = vsel %vm286, %v311, 0.0
      %319 = vadd.xlane.f32.xlu0 %v318
      %v320 = vpop.xlane.xlu0 %319
      %v321 = vmul.f32 %v314, %v302
      %v322 = vmul.f32 %v317, %v302
      %v323 = vmul.f32 %v320, %v302
      %v324 = vadd.f32 %v321, 1e-05
      %v325 = vadd.f32 %v322, 1e-05
      %v326 = vadd.f32 %v323, 1e-05
      %v327 = vrsqrt.pop %v324
      %v328 = vmul.f32 %v327, %v324
      %v329 = vmul.f32 %v328, %v327
      %v330 = vmul.f32 0.5, %v329
      %v331 = vsub.f32 1.5, %v330
      %v332 = vmul.f32 %v327, %v331
      %vm333 = vweird.f32 %v324
      %vm334 = vweird.f32 %v327
      %vm335 = vmor %vm333, %vm334
      %v336 = vsel %vm335, %v327, %v332
      %v337 = vrsqrt.pop %v325
      %v338 = vmul.f32 %v337, %v325
      %v339 = vmul.f32 %v338, %v337
      %v340 = vmul.f32 0.5, %v339
      %v341 = vsub.f32 1.5, %v340
      %v342 = vmul.f32 %v337, %v341
      %vm343 = vweird.f32 %v325
      %vm344 = vweird.f32 %v337
      %vm345 = vmor %vm343, %vm344
      %v346 = vsel %vm345, %v337, %v342
      %v347 = vrsqrt.pop %v326
      %v348 = vmul.f32 %v347, %v326
      %v349 = vmul.f32 %v348, %v347
      %v350 = vmul.f32 0.5, %v349
      %v351 = vsub.f32 1.5, %v350
      %v352 = vmul.f32 %v347, %v351
      %vm353 = vweird.f32 %v326
      %vm354 = vweird.f32 %v347
      %vm355 = vmor %vm353, %vm354
      %v356 = vsel %vm355, %v347, %v352
      %v357 = vmul.f32 %v306, %v336
      %v358 = vmul.f32 %v307, %v346
      %v359 = vmul.f32 %v308, %v356
      %v360 = vld [vmem:[%s1] sm:$0x1]
      %v362 = vperm.slane %v360, 0
      %v364 = vmul.f32 %v357, %v362
      %v365 = vmul.f32 %v358, %v362
      %v366 = vmul.f32 %v359, %v362
      %v367 = vld [vmem:[%s2] sm:$0x1]
      %v369 = vperm.slane %v367, 0
      %v371 = vadd.f32 %v364, %v369
      %v372 = vadd.f32 %v365, %v369
      %v373 = vadd.f32 %v366, %v369
      %v374 = vpack.c.bf16 %v372, %v371
      %v375 = vpack.c.bf16 %v373, %v373
      %v376 = vld [vmem:[%s3] sm:$0xf]
      %v377 = vld [vmem:[%s3 + $0x4] sm:$0xf]
      %v378 = vld [vmem:[%s3 + $0x8] sm:$0xf]
      %v379 = vld [vmem:[%s3 + $0xc] sm:$0xf]
      %v380 = vld [vmem:[%s4] sm:$0x1]
      %v382 = vperm.slane %v380, 0
      %v388 = vunpack.c.l.b16 %v376
      %v389 = vunpack.c.l.b16 %v377
      %v390 = vunpack.c.l.b16 %v378
      %v391 = vunpack.c.l.b16 %v379
      %v392 = vpack.c.b16 %v389, %v388
      %v393 = vpack.c.b16 %v391, %v390
      %v397 = vsel %vm286, %v374, 0
      %v400 = vsel %vm286, %v375, 0
      %402 = vmatpush.bf16.msra.mxu0 0
      %403 = vmatpush.bf16.msra.mxu0 0
      %404 = vmatpush.bf16.msra.mxu0 0
      %405 = vmatpush.bf16.msra.mxu0 0
      %406 = vmatpush.bf16.msra.mxu0 0
      %407 = vmatpush.bf16.msra.mxu0 0
      %408 = vmatpush.bf16.msra.mxu0 %v393
      %409 = vmatpush.bf16.msra.mxu0 %v392
      %410 = vmatmul.bf16.gmra.mxu0 %v397
      %v411 = vpop.f32.mrf.mxu0
      %v412 = vadd.f32 %v382, %v411
      %v413 = vpop.f32.mrf.mxu0
      %v414 = vadd.f32 %v382, %v413
      %415 = vmatmul.bf16.gmra.mxu0 %v400
      %v416 = vpop.f32.mrf.mxu0
      %v417 = vadd.f32 %v382, %v416
      %v418 = vpop.f32.mrf.mxu0
      %419 = vdwg.mxu0
      %v420 = vmax.f32 %v412, 0.0
      %v421 = vmax.f32 %v414, 0.0
      %v422 = vmax.f32 %v417, 0.0
      %v423 = vpack.c.bf16 %v421, %v420
      %v424 = vpack.c.bf16 %v422, %v422
      %v425 = vld [vmem:[%s5] sm:$0xf]
      %v426 = vld [vmem:[%s5 + $0x4] sm:$0xf]
      %v427 = vld [vmem:[%s5 + $0x8] sm:$0xf]
      %v428 = vld [vmem:[%s5 + $0xc] sm:$0xf]
      %v429 = vld [vmem:[%s5 + $0x10] sm:$0xf]
      %v430 = vld [vmem:[%s5 + $0x14] sm:$0xf]
      %v431 = vld [vmem:[%s5 + $0x18] sm:$0xf]
      %v432 = vld [vmem:[%s5 + $0x1c] sm:$0xf]
      %v433 = vld [vmem:[%s6] sm:$0x1]
      %v435 = vperm.slane %v433, 0
      %v445 = vunpack.c.l.b16 %v425
      %v446 = vunpack.c.l.b16 %v426
      %v447 = vunpack.c.l.b16 %v427
      %v448 = vunpack.c.l.b16 %v428
      %v449 = vunpack.c.l.b16 %v429
      %v450 = vunpack.c.l.b16 %v430
      %v451 = vunpack.c.l.b16 %v431
      %v452 = vunpack.c.l.b16 %v432
      %v453 = vpack.c.b16 %v446, %v445
      %v454 = vpack.c.b16 %v448, %v447
      %v455 = vpack.c.b16 %v450, %v449
      %v456 = vpack.c.b16 %v452, %v451
      %vm461 = vcmask 523264
      %v463 = vsel %vm461, %v423, 0
      %v466 = vsel %vm461, %v424, 0
      %468 = vmatpush.bf16.msra.mxu0 0
      %469 = vmatpush.bf16.msra.mxu0 0
      %470 = vmatpush.bf16.msra.mxu0 0
      %471 = vmatpush.bf16.msra.mxu0 0
      %472 = vmatpush.bf16.msra.mxu0 %v456
      %473 = vmatpush.bf16.msra.mxu0 %v455
      %474 = vmatpush.bf16.msra.mxu0 %v454
      %475 = vmatpush.bf16.msra.mxu0 %v453
      %476 = vmatmul.bf16.gmra.mxu0 %v463
      %v477 = vpop.f32.mrf.mxu0
      %v478 = vadd.f32 %v435, %v477
      %v479 = vpop.f32.mrf.mxu0
      %v480 = vadd.f32 %v435, %v479
      %481 = vmatmul.bf16.gmra.mxu0 %v466
      %v482 = vpop.f32.mrf.mxu0
      %v483 = vadd.f32 %v435, %v482
      %v484 = vpop.f32.mrf.mxu0
      %485 = vdwg.mxu0
      %v486 = vadd.f32 %v478, %v283
      %v487 = vadd.f32 %v480, %v284
      %v488 = vadd.f32 %v483, %v285
      %489 = vst.msk [vmem:[%s280] sm:$0xff] %vm286, %v486
      %490 = vst.msk [vmem:[%s280 + $0x8] sm:$0xff] %vm286, %v487
      %491 = vst.msk [vmem:[%s280 + $0x10] sm:$0xff] %vm286, %v488
      %s492 = smul.u32 3, %s18
      %p493 = scmp.lt.s32.totalorder %s492, 5
      %s494 = scalar_select %p493, %s492, 5
      %s495 = smul.addr %s494, 8
      %s496 = scalar_lea.vmem %s7, %s495
      // Predicated region
      $region49: #{vit_classification_forward.8} parent=47 // pred_check
        %p497 = pneg %p188
      $region50: #{vit_classification_forward.8} parent=47 // pred_check_branch
        %499 = sbr.rel (%p497) target = $region52
      $region51: #{vit_classification_forward.8} parent=47 // pred_region
        %s500 = smul.u32 3, %s18
      $region52: #{vit_classification_forward.8} parent=47 // pred_fallthru
        _
    $region48: #{vit_classification_forward.8} parent=5 // pred_fallthru
      _
    %p501 = scmp.le.s32.totalorder 2, %s13
    // Predicated region
    $region53: #{vit_classification_forward.8} parent=5 // pred_check
      %p502 = pneg %p501
    $region54: #{vit_classification_forward.8} parent=5 // pred_check_branch
      %504 = sbr.rel (%p502) target = $region56
    $region55: #{vit_classification_forward.8} parent=5 // pred_region
      %s505 = ssub.s32 %s13, 2
      // Predicated region
      $region57: #{vit_classification_forward.8} parent=55 // pred_check
        %p506 = pneg %p194
      $region58: #{vit_classification_forward.8} parent=55 // pred_check_branch
        %508 = sbr.rel (%p506) target = $region60
      $region59: #{vit_classification_forward.8} parent=55 // pred_region
        %s509 = smul.u32 3, %s19
        %p510 = scmp.lt.s32.totalorder %s509, 5
        %s511 = scalar_select %p510, %s509, 5
        %s512 = smul.addr %s511, 8
        %s513 = scalar_lea.vmem %s7, %s512
      $region60: #{vit_classification_forward.8} parent=55 // pred_fallthru
        _
    $region56: #{vit_classification_forward.8} parent=5 // pred_fallthru
      _
  $region6: #{vit_classification_forward.8} parent=0 // loop_footer
    %s17 = sadd.s32 1, %s13
  $region7: #{vit_classification_forward.8} parent=0 // loop_footer_branch
    %12 = sbr.rel target = $region3
  $region8: #{vit_classification_forward.8} parent=0 // loop_exit
    _

// kernel: vit_classification_forward.7
$region0: #{vit_classification_forward.7}
  #allocation0 [shape = 'u32[]', space=smem, size = 0x4, offset = 0x4, fixed_abs, tag = 'smem constant byte address 0x4 - core index']
  #allocation1 [shape = 'u32[72,128]{1,0:T(1,128)}', space=vmem, size = 0x9000, scoped, tag = 'internal scratch']
  #allocation2 [shape = 'bf16[24,96]{1,0:T(8,128)(2,1)}', space=vmem, size = 0x1800, scoped, tag = 'scratch operand']
  #allocation3 [shape = 'bf16[24,32]{1,0:T(8,128)(2,1)}', space=vmem, size = 0x1800, scoped, tag = 'scratch operand']
  %s0 = inlined_call_operand.vmem [shape: f32[2,24,32], index: 0, kind: input, shape index: {}]
  %s1 = inlined_call_operand.vmem [shape: f32[1,32], index: 1, kind: input, shape index: {}]
  %s2 = inlined_call_operand.vmem [shape: f32[1,32], index: 2, kind: input, shape index: {}]
  %s3 = inlined_call_operand.vmem [shape: bf16[32,96], index: 3, kind: input, shape index: {}]
  %s4 = inlined_call_operand.vmem [shape: f32[1,96], index: 4, kind: input, shape index: {}]
  %s5 = inlined_call_operand.vmem [shape: bf16[32,32], index: 5, kind: input, shape index: {}]
  %s6 = inlined_call_operand.vmem [shape: f32[1,32], index: 6, kind: input, shape index: {}]
  %s7 = inlined_call_operand.vmem [shape: f32[2,24,32], index: 7, kind: output, shape index: {}]
  %s8 = sld [smem:[#allocation0]]
  $region61: #{vit_classification_forward.7} parent=0
    _
  %s10 = ssub.s32 1, %s8
  %s11 = scalar_select 0, %s10, %s8
  loop: start=0, step=1, limit=4
  $region2: #{vit_classification_forward.7} parent=0 // loop_pre_header
    _
  $region3: #{vit_classification_forward.7} parent=0 // loop_header
    %s13 = sphi 0, %s17
    %p14 = scmp.ge.s32.totalorder %s13, 4
    %s23 = sphi 0, %s25
    %s26 = sphi 0, %s23
    %s27 = sphi 0, %s26
    %s43 = sphi 0, %s27
    %s47 = sphi 0, %s47
    %s49 = sphi 0, %s47
    %s50 = sphi 0, %s49
    %s64 = sphi 0, %s50
    %s68 = sphi 0, %s68
    %s70 = sphi 0, %s68
    %s71 = sphi 0, %s70
    %s85 = sphi 0, %s71
    %s89 = sphi 0, %s89
    %s91 = sphi 0, %s89
    %s92 = sphi 0, %s91
    %s106 = sphi 0, %s92
    %s110 = sphi 0, %s110
    %s112 = sphi 0, %s110
    %s113 = sphi 0, %s112
    %s127 = sphi 0, %s113
    %s131 = sphi 0, %s131
    %s133 = sphi 0, %s131
    %s134 = sphi 0, %s133
    %s148 = sphi 0, %s134
    %s152 = sphi 0, %s152
    %s154 = sphi 0, %s152
    %s155 = sphi 0, %s154
    %s169 = sphi 0, %s155
    %s175 = sphi 0, %s177
    %s178 = sphi 0, %s175
    %s179 = sphi 0, %s178
    %s195 = sphi 0, %s179
  $region4: #{vit_classification_forward.7} parent=0 // loop_header_branch
    %16 = sbr.rel (%p14) target = $region8
  $region5: #{vit_classification_forward.7} parent=0 // loop_body
    %s18 = ssub.s32 %s13, 1
    %s19 = ssub.s32 %s13, 2
    %s20 = sadd.s32 %s13, 1
    %s21 = ssub.s32 %s13, %s20
    %p22 = scmp.eq.s32.totalorder %s21, 0
    %s24 = sadd.s32 %s23, 1
    %s25 = scalar_select %p22, %s23, %s24
    %p28 = pneg %p22
    %p29 = scmp.eq.s32.totalorder %s13, 1
    %p30 = por %p28, %p29
    %p31 = scmp.ne.s32.totalorder %s23, %s26
    %p32 = scmp.eq.s32.totalorder %s13, 0
    %p33 = por %p31, %p32
    %p34 = scmp.ne.s32.totalorder %s23, %s26
    %p35 = scmp.eq.s32.totalorder %s18, 1
    %p36 = por %p34, %p35
    %p37 = scmp.ne.s32.totalorder %s26, %s27
    %p38 = scmp.eq.s32.totalorder %s18, 0
    %p39 = por %p37, %p38
    %p40 = scmp.ne.s32.totalorder %s26, %s27
    %p41 = scmp.eq.s32.totalorder %s19, 1
    %p42 = por %p40, %p41
    %p44 = scmp.ne.s32.totalorder %s27, %s43
    %p45 = scmp.eq.s32.totalorder %s19, 0
    %p46 = por %p44, %p45
    %s48 = sadd.s32 %s47, 1
    %p51 = scmp.eq.s32.totalorder %s13, 1
    %p52 = scmp.ne.s32.totalorder %s47, %s49
    %p53 = scmp.eq.s32.totalorder %s13, 0
    %p54 = por %p52, %p53
    %p55 = scmp.ne.s32.totalorder %s47, %s49
    %p56 = scmp.eq.s32.totalorder %s18, 1
    %p57 = por %p55, %p56
    %p58 = scmp.ne.s32.totalorder %s49, %s50
    %p59 = scmp.eq.s32.totalorder %s18, 0
    %p60 = por %p58, %p59
    %p61 = scmp.ne.s32.totalorder %s49, %s50
    %p62 = scmp.eq.s32.totalorder %s19, 1
    %p63 = por %p61, %p62
    %p65 = scmp.ne.s32.totalorder %s50, %s64
    %p66 = scmp.eq.s32.totalorder %s19, 0
    %p67 = por %p65, %p66
    %s69 = sadd.s32 %s68, 1
    %p72 = scmp.eq.s32.totalorder %s13, 1
    %p73 = scmp.ne.s32.totalorder %s68, %s70
    %p74 = scmp.eq.s32.totalorder %s13, 0
    %p75 = por %p73, %p74
    %p76 = scmp.ne.s32.totalorder %s68, %s70
    %p77 = scmp.eq.s32.totalorder %s18, 1
    %p78 = por %p76, %p77
    %p79 = scmp.ne.s32.totalorder %s70, %s71
    %p80 = scmp.eq.s32.totalorder %s18, 0
    %p81 = por %p79, %p80
    %p82 = scmp.ne.s32.totalorder %s70, %s71
    %p83 = scmp.eq.s32.totalorder %s19, 1
    %p84 = por %p82, %p83
    %p86 = scmp.ne.s32.totalorder %s71, %s85
    %p87 = scmp.eq.s32.totalorder %s19, 0
    %p88 = por %p86, %p87
    %s90 = sadd.s32 %s89, 1
    %p93 = scmp.eq.s32.totalorder %s13, 1
    %p94 = scmp.ne.s32.totalorder %s89, %s91
    %p95 = scmp.eq.s32.totalorder %s13, 0
    %p96 = por %p94, %p95
    %p97 = scmp.ne.s32.totalorder %s89, %s91
    %p98 = scmp.eq.s32.totalorder %s18, 1
    %p99 = por %p97, %p98
    %p100 = scmp.ne.s32.totalorder %s91, %s92
    %p101 = scmp.eq.s32.totalorder %s18, 0
    %p102 = por %p100, %p101
    %p103 = scmp.ne.s32.totalorder %s91, %s92
    %p104 = scmp.eq.s32.totalorder %s19, 1
    %p105 = por %p103, %p104
    %p107 = scmp.ne.s32.totalorder %s92, %s106
    %p108 = scmp.eq.s32.totalorder %s19, 0
    %p109 = por %p107, %p108
    %s111 = sadd.s32 %s110, 1
    %p114 = scmp.eq.s32.totalorder %s13, 1
    %p115 = scmp.ne.s32.totalorder %s110, %s112
    %p116 = scmp.eq.s32.totalorder %s13, 0
    %p117 = por %p115, %p116
    %p118 = scmp.ne.s32.totalorder %s110, %s112
    %p119 = scmp.eq.s32.totalorder %s18, 1
    %p120 = por %p118, %p119
    %p121 = scmp.ne.s32.totalorder %s112, %s113
    %p122 = scmp.eq.s32.totalorder %s18, 0
    %p123 = por %p121, %p122
    %p124 = scmp.ne.s32.totalorder %s112, %s113
    %p125 = scmp.eq.s32.totalorder %s19, 1
    %p126 = por %p124, %p125
    %p128 = scmp.ne.s32.totalorder %s113, %s127
    %p129 = scmp.eq.s32.totalorder %s19, 0
    %p130 = por %p128, %p129
    %s132 = sadd.s32 %s131, 1
    %p135 = scmp.eq.s32.totalorder %s13, 1
    %p136 = scmp.ne.s32.totalorder %s131, %s133
    %p137 = scmp.eq.s32.totalorder %s13, 0
    %p138 = por %p136, %p137
    %p139 = scmp.ne.s32.totalorder %s131, %s133
    %p140 = scmp.eq.s32.totalorder %s18, 1
    %p141 = por %p139, %p140
    %p142 = scmp.ne.s32.totalorder %s133, %s134
    %p143 = scmp.eq.s32.totalorder %s18, 0
    %p144 = por %p142, %p143
    %p145 = scmp.ne.s32.totalorder %s133, %s134
    %p146 = scmp.eq.s32.totalorder %s19, 1
    %p147 = por %p145, %p146
    %p149 = scmp.ne.s32.totalorder %s134, %s148
    %p150 = scmp.eq.s32.totalorder %s19, 0
    %p151 = por %p149, %p150
    %s153 = sadd.s32 %s152, 1
    %p156 = scmp.eq.s32.totalorder %s13, 1
    %p157 = scmp.ne.s32.totalorder %s152, %s154
    %p158 = scmp.eq.s32.totalorder %s13, 0
    %p159 = por %p157, %p158
    %p160 = scmp.ne.s32.totalorder %s152, %s154
    %p161 = scmp.eq.s32.totalorder %s18, 1
    %p162 = por %p160, %p161
    %p163 = scmp.ne.s32.totalorder %s154, %s155
    %p164 = scmp.eq.s32.totalorder %s18, 0
    %p165 = por %p163, %p164
    %p166 = scmp.ne.s32.totalorder %s154, %s155
    %p167 = scmp.eq.s32.totalorder %s19, 1
    %p168 = por %p166, %p167
    %p170 = scmp.ne.s32.totalorder %s155, %s169
    %p171 = scmp.eq.s32.totalorder %s19, 0
    %p172 = por %p170, %p171
    %s173 = ssub.s32 %s13, %s20
    %p174 = scmp.eq.s32.totalorder %s173, 0
    %s176 = sadd.s32 %s175, 1
    %s177 = scalar_select %p174, %s175, %s176
    %p180 = pneg %p174
    %p181 = scmp.eq.s32.totalorder %s13, 1
    %p182 = por %p180, %p181
    %p183 = scmp.ne.s32.totalorder %s175, %s178
    %p184 = scmp.eq.s32.totalorder %s13, 0
    %p185 = por %p183, %p184
    %p186 = scmp.ne.s32.totalorder %s175, %s178
    %p187 = scmp.eq.s32.totalorder %s18, 1
    %p188 = por %p186, %p187
    %p189 = scmp.ne.s32.totalorder %s178, %s179
    %p190 = scmp.eq.s32.totalorder %s18, 0
    %p191 = por %p189, %p190
    %p192 = scmp.ne.s32.totalorder %s178, %s179
    %p193 = scmp.eq.s32.totalorder %s19, 1
    %p194 = por %p192, %p193
    %p196 = scmp.ne.s32.totalorder %s179, %s195
    %p197 = scmp.eq.s32.totalorder %s19, 0
    %p198 = por %p196, %p197
    %p199 = scmp.le.s32.totalorder 1, %s13
    %p200 = scmp.lt.s32.totalorder %s13, 3
    %p201 = pnand %p199, %p200
    %p202 = pneg %p201
    // Predicated region
    $region9: #{vit_classification_forward.7} parent=5 // pred_check
      _
    $region10: #{vit_classification_forward.7} parent=5 // pred_check_branch
      %204 = sbr.rel (%p201) target = $region12
    $region11: #{vit_classification_forward.7} parent=5 // pred_region
      %s205 = ssub.s32 %s13, 1
      // Predicated region
      $region13: #{vit_classification_forward.7} parent=11 // pred_check
        %p206 = pneg %p60
      $region14: #{vit_classification_forward.7} parent=11 // pred_check_branch
        %208 = sbr.rel (%p206) target = $region16
      $region15: #{vit_classification_forward.7} parent=11 // pred_region
        _
      $region16: #{vit_classification_forward.7} parent=11 // pred_fallthru
        _
      // Predicated region
      $region17: #{vit_classification_forward.7} parent=11 // pred_check
        %p209 = pneg %p81
      $region18: #{vit_classification_forward.7} parent=11 // pred_check_branch
        %211 = sbr.rel (%p209) target = $region20
      $region19: #{vit_classification_forward.7} parent=11 // pred_region
        _
      $region20: #{vit_classification_forward.7} parent=11 // pred_fallthru
        _
      // Predicated region
      $region21: #{vit_classification_forward.7} parent=11 // pred_check
        %p212 = pneg %p102
      $region22: #{vit_classification_forward.7} parent=11 // pred_check_branch
        %214 = sbr.rel (%p212) target = $region24
      $region23: #{vit_classification_forward.7} parent=11 // pred_region
        _
      $region24: #{vit_classification_forward.7} parent=11 // pred_fallthru
        _
      // Predicated region
      $region25: #{vit_classification_forward.7} parent=11 // pred_check
        %p215 = pneg %p123
      $region26: #{vit_classification_forward.7} parent=11 // pred_check_branch
        %217 = sbr.rel (%p215) target = $region28
      $region27: #{vit_classification_forward.7} parent=11 // pred_region
        _
      $region28: #{vit_classification_forward.7} parent=11 // pred_fallthru
        _
      // Predicated region
      $region29: #{vit_classification_forward.7} parent=11 // pred_check
        %p218 = pneg %p144
      $region30: #{vit_classification_forward.7} parent=11 // pred_check_branch
        %220 = sbr.rel (%p218) target = $region32
      $region31: #{vit_classification_forward.7} parent=11 // pred_region
        _
      $region32: #{vit_classification_forward.7} parent=11 // pred_fallthru
        _
      // Predicated region
      $region33: #{vit_classification_forward.7} parent=11 // pred_check
        %p221 = pneg %p165
      $region34: #{vit_classification_forward.7} parent=11 // pred_check_branch
        %223 = sbr.rel (%p221) target = $region36
      $region35: #{vit_classification_forward.7} parent=11 // pred_region
        _
      $region36: #{vit_classification_forward.7} parent=11 // pred_fallthru
        _
    $region12: #{vit_classification_forward.7} parent=5 // pred_fallthru
      _
    %p224 = scmp.lt.s32.totalorder %s13, 2
    // Predicated region
    $region37: #{vit_classification_forward.7} parent=5 // pred_check
      %p225 = pneg %p224
    $region38: #{vit_classification_forward.7} parent=5 // pred_check_branch
      %227 = sbr.rel (%p225) target = $region40
    $region39: #{vit_classification_forward.7} parent=5 // pred_region
      // Predicated region
      $region41: #{vit_classification_forward.7} parent=39 // pred_check
        %p228 = pneg %p33
      $region42: #{vit_classification_forward.7} parent=39 // pred_check_branch
        %230 = sbr.rel (%p228) target = $region44
      $region43: #{vit_classification_forward.7} parent=39 // pred_region
        %p231 = scmp.lt.s32.totalorder %s13, 1
        %s232 = scalar_select %p231, %s13, 1
        %s233 = smul.addr %s232, 3
        %s234 = smul.addr %s233, 8
        %s235 = scalar_lea.vmem %s0, %s234
      $region44: #{vit_classification_forward.7} parent=39 // pred_fallthru
        _
    $region40: #{vit_classification_forward.7} parent=5 // pred_fallthru
      _
    %p236 = scmp.le.s32.totalorder 1, %s13
    %p237 = scmp.lt.s32.totalorder %s13, 3
    %p238 = pnand %p236, %p237
    %p239 = pneg %p238
    // Predicated region
    $region45: #{vit_classification_forward.7} parent=5 // pred_check
      _
    $region46: #{vit_classification_forward.7} parent=5 // pred_check_branch
      %241 = sbr.rel (%p238) target = $region48
    $region47: #{vit_classification_forward.7} parent=5 // pred_region
      %s242 = ssub.s32 %s13, 1
      %p243 = scmp.lt.s32.totalorder %s18, 1
      %s244 = scalar_select %p243, %s18, 1
      %s245 = smul.addr %s244, 3
      %s246 = smul.addr %s245, 8
      %s247 = scalar_lea.vmem %s0, %s246
      %p248 = pneg %p39
      %p249 = pneg %p36
      %p250 = pneg %p60
      %p251 = pneg %p57
      %p252 = pneg %p81
      %p253 = pneg %p78
      %p254 = pneg %p102
      %p255 = pneg %p99
      %p256 = pneg %p123
      %p257 = pneg %p120
      %p258 = pneg %p144
      %p259 = pneg %p141
      %p260 = pneg %p165
      %p261 = pneg %p162
      %p262 = pneg %p191
      %p263 = pneg %p188
      %p264 = scmp.lt.s32.totalorder %s18, 1
      %s265 = scalar_select %p264, %s18, 1
      %s266 = smul.addr %s265, 3
      %s267 = smul.addr %s266, 8
      %s268 = scalar_lea.vmem %s7, %s267
      %p269 = scmp.lt.s32.totalorder %s18, 1
      %s270 = scalar_select %p269, %s18, 1
      %s271 = smul.addr %s270, 3
      %s272 = smul.addr %s271, 8
      %s273 = scalar_lea.vmem %s0, %s272
      %p274 = scmp.lt.s32.totalorder %s18, 1
      %s275 = scalar_select %p274, %s18, 1
      %s276 = smul.addr %s275, 3
      %s277 = smul.addr %s276, 8
      %s278 = scalar_lea.vmem %s7, %s277
      %v280 = vld [vmem:[%s273] sm:$0xff]
      %v281 = vld [vmem:[%s273 + $0x8] sm:$0xff]
      %v282 = vld [vmem:[%s273 + $0x10] sm:$0xff]
      %vm283 = vcmask 261120
      %v284 = vsel %vm283, %v280, 0.0
      %285 = vadd.xlane.f32.xlu0 %v284
      %v286 = vpop.xlane.xlu0 %285
      %v287 = vsel %vm283, %v281, 0.0
      %288 = vadd.xlane.f32.xlu0 %v287
      %v289 = vpop.xlane.xlu0 %288
      %v290 = vsel %vm283, %v282, 0.0
      %291 = vadd.xlane.f32.xlu0 %v290
      %v292 = vpop.xlane.xlu0 %291
      %v293 = vrcp.pop 32.0
      %v294 = vmul.f32 32.0, %v293
      %v295 = vsub.f32 1.0, %v294
      %v296 = vmul.f32 %v293, %v295
      %v297 = vadd.f32 %v293, %v296
      %vm298 = vweird.f32 %v293
      %v299 = vsel %vm298, %v293, %v297
      %v300 = vmul.f32 %v286, %v299
      %v301 = vmul.f32 %v289, %v299
      %v302 = vmul.f32 %v292, %v299
      %v303 = vsub.f32 %v280, %v300
      %v304 = vsub.f32 %v281, %v301
      %v305 = vsub.f32 %v282, %v302
      %v306 = vmul.f32 %v303, %v303
      %v307 = vmul.f32 %v304, %v304
      %v308 = vmul.f32 %v305, %v305
      %v309 = vsel %vm283, %v306, 0.0
      %310 = vadd.xlane.f32.xlu0 %v309
      %v311 = vpop.xlane.xlu0 %310
      %v312 = vsel %vm283, %v307, 0.0
      %313 = vadd.xlane.f32.xlu0 %v312
      %v314 = vpop.xlane.xlu0 %313
      %v315 = vsel %vm283, %v308, 0.0
      %316 = vadd.xlane.f32.xlu0 %v315
      %v317 = vpop.xlane.xlu0 %316
      %v318 = vmul.f32 %v311, %v299
      %v319 = vmul.f32 %v314, %v299
      %v320 = vmul.f32 %v317, %v299
      %v321 = vadd.f32 %v318, 1e-05
      %v322 = vadd.f32 %v319, 1e-05
      %v323 = vadd.f32 %v320, 1e-05
      %v324 = vrsqrt.pop %v321
      %v325 = vmul.f32 %v324, %v321
      %v326 = vmul.f32 %v325, %v324
      %v327 = vmul.f32 0.5, %v326
      %v328 = vsub.f32 1.5, %v327
      %v329 = vmul.f32 %v324, %v328
      %vm330 = vweird.f32 %v321
      %vm331 = vweird.f32 %v324
      %vm332 = vmor %vm330, %vm331
      %v333 = vsel %vm332, %v324, %v329
      %v334 = vrsqrt.pop %v322
      %v335 = vmul.f32 %v334, %v322
      %v336 = vmul.f32 %v335, %v334
      %v337 = vmul.f32 0.5, %v336
      %v338 = vsub.f32 1.5, %v337
      %v339 = vmul.f32 %v334, %v338
      %vm340 = vweird.f32 %v322
      %vm341 = vweird.f32 %v334
      %vm342 = vmor %vm340, %vm341
      %v343 = vsel %vm342, %v334, %v339
      %v344 = vrsqrt.pop %v323
      %v345 = vmul.f32 %v344, %v323
      %v346 = vmul.f32 %v345, %v344
      %v347 = vmul.f32 0.5, %v346
      %v348 = vsub.f32 1.5, %v347
      %v349 = vmul.f32 %v344, %v348
      %vm350 = vweird.f32 %v323
      %vm351 = vweird.f32 %v344
      %vm352 = vmor %vm350, %vm351
      %v353 = vsel %vm352, %v344, %v349
      %v354 = vmul.f32 %v303, %v333
      %v355 = vmul.f32 %v304, %v343
      %v356 = vmul.f32 %v305, %v353
      %v357 = vld [vmem:[%s1] sm:$0x1]
      %v359 = vperm.slane %v357, 0
      %v361 = vmul.f32 %v354, %v359
      %v362 = vmul.f32 %v355, %v359
      %v363 = vmul.f32 %v356, %v359
      %v364 = vld [vmem:[%s2] sm:$0x1]
      %v366 = vperm.slane %v364, 0
      %v368 = vadd.f32 %v361, %v366
      %v369 = vadd.f32 %v362, %v366
      %v370 = vadd.f32 %v363, %v366
      %v371 = vpack.c.bf16 %v369, %v368
      %v372 = vpack.c.bf16 %v370, %v370
      %v373 = vld [vmem:[%s3] sm:$0xf]
      %v374 = vld [vmem:[%s3 + $0x4] sm:$0xf]
      %v375 = vld [vmem:[%s3 + $0x8] sm:$0xf]
      %v376 = vld [vmem:[%s3 + $0xc] sm:$0xf]
      %v377 = vld [vmem:[%s4] sm:$0x1]
      %v379 = vperm.slane %v377, 0
      %v385 = vunpack.c.l.b16 %v373
      %v386 = vunpack.c.l.b16 %v374
      %v387 = vunpack.c.l.b16 %v375
      %v388 = vunpack.c.l.b16 %v376
      %v389 = vpack.c.b16 %v386, %v385
      %v390 = vpack.c.b16 %v388, %v387
      %v394 = vsel %vm283, %v371, 0
      %v397 = vsel %vm283, %v372, 0
      %399 = vmatpush.bf16.msra.mxu0 0
      %400 = vmatpush.bf16.msra.mxu0 0
      %401 = vmatpush.bf16.msra.mxu0 0
      %402 = vmatpush.bf16.msra.mxu0 0
      %403 = vmatpush.bf16.msra.mxu0 0
      %404 = vmatpush.bf16.msra.mxu0 0
      %405 = vmatpush.bf16.msra.mxu0 %v390
      %406 = vmatpush.bf16.msra.mxu0 %v389
      %407 = vmatmul.bf16.gmra.mxu0 %v394
      %v408 = vpop.f32.mrf.mxu0
      %v409 = vadd.f32 %v379, %v408
      %v410 = vpop.f32.mrf.mxu0
      %v411 = vadd.f32 %v379, %v410
      %412 = vmatmul.bf16.gmra.mxu0 %v397
      %v413 = vpop.f32.mrf.mxu0
      %v414 = vadd.f32 %v379, %v413
      %v415 = vpop.f32.mrf.mxu0
      %416 = vdwg.mxu0
      %v417 = vpack.c.bf16 %v409, %v409
      %v418 = vpack.c.bf16 %v411, %v411
      %v419 = vpack.c.bf16 %v414, %v414
      %vm420 = vcmask 781312
      %421 = vst.msk [vmem:[#allocation2] sm:$0xf] %vm420, %v417
      %422 = vst.msk [vmem:[#allocation2 + $0x4] sm:$0xf] %vm420, %v418
      %423 = vst.msk [vmem:[#allocation2 + $0x8] sm:$0xf] %vm420, %v419
      %v424 = vlaneseq
      %v425 = vand.u32 %v424, 127
      %vm426 = vcmp.lt.s32.totalorder %v425, 17
      %v427 = vsel %vm426, 0.0, -1e+30
      %v428 = vld [vmem:[#allocation2] sm:$0xf]
      %v429 = vld [vmem:[#allocation2 + $0x4] sm:$0xf]
      %v430 = vld [vmem:[#allocation2 + $0x8] sm:$0xf]
      %v434 = vunpack.c.l.b16 %v428
      %v435 = vunpack.c.l.b16 %v429
      %v436 = vunpack.c.l.b16 %v430
      %v437 = vpack.c.b16 %v435, %v434
      %v438 = vpack.c.b16 %v436, %v436
      %439 = vrot.lane.b32.xlu0 %v437, 96
      %v440 = vpop.permute.xlu0 %439
      %441 = vrot.lane.b32.xlu0 %v438, 96
      %v442 = vpop.permute.xlu0 %441
      %vm443 = vcmask 64512
      %v445 = vsel %vm443, %v437, 0
      %v448 = vsel %vm443, %v438, 0
      %v451 = vsel %vm443, %v440, 0
      %v454 = vsel %vm443, %v442, 0
      %456 = vmatpush.bf16.xpose.msra.mxu0 0
      %457 = vmatpush.bf16.xpose.msra.mxu0 0
      %458 = vmatpush.bf16.xpose.msra.mxu0 0
      %459 = vmatpush.bf16.xpose.msra.mxu0 0
      %460 = vmatpush.bf16.xpose.msra.mxu0 0
      %461 = vmatpush.bf16.xpose.msra.mxu0 0
      %462 = vmatpush.bf16.xpose.msra.mxu0 %v454
      %463 = vmatpush.bf16.xpose.msra.mxu0 %v451
      %464 = vmatmul.bf16.gmra.mxu0 %v445
      %v465 = vpop.f32.mrf.mxu0
      %v466 = vadd.f32 0.0, %v465
      %v467 = vpop.f32.mrf.mxu0
      %v468 = vadd.f32 0.0, %v467
      %469 = vmatmul.bf16.gmra.mxu0 %v448
      %v470 = vpop.f32.mrf.mxu0
      %v471 = vadd.f32 0.0, %v470
      %v472 = vpop.f32.mrf.mxu0
      %473 = vdwg.mxu0
      %v474 = vmul.f32 %v466, 0.35355338
      %v475 = vmul.f32 %v468, 0.35355338
      %v476 = vmul.f32 %v471, 0.35355338
      %v477 = vadd.f32 %v474, %v427
      %v478 = vadd.f32 %v475, %v427
      %v479 = vadd.f32 %v476, %v427
      %vm480 = vcmask 195584
      %v481 = vsel %vm480, %v477, -inf
      %482 = vmax.xlane.f32.xlu0 %v481
      %v483 = vpop.xlane.xlu0 %482
      %v484 = vsel %vm480, %v478, -inf
      %485 = vmax.xlane.f32.xlu0 %v484
      %v486 = vpop.xlane.xlu0 %485
      %v487 = vsel %vm480, %v479, -inf
      %488 = vmax.xlane.f32.xlu0 %v487
      %v489 = vpop.xlane.xlu0 %488
      %v490 = vsub.f32 %v477, %v483
      %v491 = vsub.f32 %v478, %v486
      %v492 = vsub.f32 %v479, %v489
      %v493 = vmul.f32 %v490, 1.442695
      %v494 = vpow.pop %v493
      %v495 = vmul.f32 %v491, 1.442695
      %v496 = vpow.pop %v495
      %v497 = vmul.f32 %v492, 1.442695
      %v498 = vpow.pop %v497
      %v499 = vsel %vm480, %v494, 0.0
      %500 = vadd.xlane.f32.xlu0 %v499
      %v501 = vpop.xlane.xlu0 %500
      %v502 = vsel %vm480, %v496, 0.0
      %503 = vadd.xlane.f32.xlu0 %v502
      %v504 = vpop.xlane.xlu0 %503
      %v505 = vsel %vm480, %v498, 0.0
      %506 = vadd.xlane.f32.xlu0 %v505
      %v507 = vpop.xlane.xlu0 %506
      %v508 = vrcp.pop %v501
      %v509 = vrcp.pop %v504
      %v510 = vrcp.pop %v507
      %v511 = vmul.f32 %v494, %v508
      %v512 = vmul.f32 %v496, %v509
      %v513 = vmul.f32 %v498, %v510
      %v514 = vpack.c.bf16 %v512, %v511
      %v515 = vpack.c.bf16 %v513, %v513
      %516 = vrot.lane.b32.xlu0 %v437, 64
      %v517 = vpop.permute.xlu0 %516
      %518 = vrot.lane.b32.xlu0 %v438, 64
      %v519 = vpop.permute.xlu0 %518
      %v522 = vsel %vm480, %v514, 0
      %v525 = vsel %vm480, %v515, 0
      %vm527 = vcmask 1043456
      %v529 = vsel %vm527, %v519, 0
      %531 = vmatpush.bf16.msra.mxu0 0
      %532 = vmatpush.bf16.msra.mxu0 0
      %533 = vmatpush.bf16.msra.mxu0 0
      %534 = vmatpush.bf16.msra.mxu0 0
      %535 = vmatpush.bf16.msra.mxu0 0
      %536 = vmatpush.bf16.msra.mxu0 0
      %537 = vmatpush.bf16.msra.mxu0 %v529
      %538 = vmatpush.bf16.msra.mxu0 %v517
      %539 = vmatmul.bf16.gmra.mxu0 %v522
      %v540 = vpop.f32.mrf.mxu0
      %v541 = vadd.f32 0.0, %v540
      %v542 = vpop.f32.mrf.mxu0
      %v543 = vadd.f32 0.0, %v542
      %544 = vmatmul.bf16.gmra.mxu0 %v525
      %v545 = vpop.f32.mrf.mxu0
      %v546 = vadd.f32 0.0, %v545
      %v547 = vpop.f32.mrf.mxu0
      %548 = vdwg.mxu0
      %v549 = vpack.c.bf16 %v541, %v541
      %v550 = vpack.c.bf16 %v543, %v543
      %v551 = vpack.c.bf16 %v546, %v546
      %vm552 = vcmask 60416
      %553 = vst.msk [vmem:[#allocation3] sm:$0xf] %vm552, %v549
      %554 = vst.msk [vmem:[#allocation3 + $0x4] sm:$0xf] %vm552, %v550
      %555 = vst.msk [vmem:[#allocation3 + $0x8] sm:$0xf] %vm552, %v551
      %v556 = vld [vmem:[#allocation2] sm:$0xf]
      %v557 = vld [vmem:[#allocation2 + $0x4] sm:$0xf]
      %v558 = vld [vmem:[#allocation2 + $0x8] sm:$0xf]
      %v562 = vunpack.c.l.b16 %v556
      %v563 = vunpack.c.l.b16 %v557
      %v564 = vunpack.c.l.b16 %v558
      %v565 = vpack.c.b16 %v563, %v562
      %v566 = vpack.c.b16 %v564, %v564
      %567 = vrot.lane.b32.xlu0 %v565, 120
      %v568 = vpop.permute.xlu0 %567
      %569 = vrot.lane.b32.xlu0 %v566, 120
      %v570 = vpop.permute.xlu0 %569
      %571 = vrot.lane.b32.xlu0 %v565, 88
      %v572 = vpop.permute.xlu0 %571
      %573 = vrot.lane.b32.xlu0 %v566, 88
      %v574 = vpop.permute.xlu0 %573
      %v576 = vsel %vm443, %v568, 0
      %v579 = vsel %vm443, %v570, 0
      %v582 = vsel %vm443, %v572, 0
      %v585 = vsel %vm443, %v574, 0
      %587 = vmatpush.bf16.xpose.msra.mxu0 0
      %588 = vmatpush.bf16.xpose.msra.mxu0 0
      %589 = vmatpush.bf16.xpose.msra.mxu0 0
      %590 = vmatpush.bf16.xpose.msra.mxu0 0
      %591 = vmatpush.bf16.xpose.msra.mxu0 0
      %592 = vmatpush.bf16.xpose.msra.mxu0 0
      %593 = vmatpush.bf16.xpose.msra.mxu0 %v585
      %594 = vmatpush.bf16.xpose.msra.mxu0 %v582
      %595 = vmatmul.bf16.gmra.mxu0 %v576
      %v596 = vpop.f32.mrf.mxu0
      %v597 = vadd.f32 0.0, %v596
      %v598 = vpop.f32.mrf.mxu0
      %v599 = vadd.f32 0.0, %v598
      %600 = vmatmul.bf16.gmra.mxu0 %v579
      %v601 = vpop.f32.mrf.mxu0
      %v602 = vadd.f32 0.0, %v601
      %v603 = vpop.f32.mrf.mxu0
      %604 = vdwg.mxu0
      %v605 = vmul.f32 %v597, 0.35355338
      %v606 = vmul.f32 %v599, 0.35355338
      %v607 = vmul.f32 %v602, 0.35355338
      %v608 = vadd.f32 %v605, %v427
      %v609 = vadd.f32 %v606, %v427
      %v610 = vadd.f32 %v607, %v427
      %v611 = vsel %vm480, %v608, -inf
      %612 = vmax.xlane.f32.xlu0 %v611
      %v613 = vpop.xlane.xlu0 %612
      %v614 = vsel %vm480, %v609, -inf
      %615 = vmax.xlane.f32.xlu0 %v614
      %v616 = vpop.xlane.xlu0 %615
      %v617 = vsel %vm480, %v610, -inf
      %618 = vmax.xlane.f32.xlu0 %v617
      %v619 = vpop.xlane.xlu0 %618
      %v620 = vsub.f32 %v608, %v613
      %v621 = vsub.f32 %v609, %v616
      %v622 = vsub.f32 %v610, %v619
      %v623 = vmul.f32 %v620, 1.442695
      %v624 = vpow.pop %v623
      %v625 = vmul.f32 %v621, 1.442695
      %v626 = vpow.pop %v625
      %v627 = vmul.f32 %v622, 1.442695
      %v628 = vpow.pop %v627
      %v629 = vsel %vm480, %v624, 0.0
      %630 = vadd.xlane.f32.xlu0 %v629
      %v631 = vpop.xlane.xlu0 %630
      %v632 = vsel %vm480, %v626, 0.0
      %633 = vadd.xlane.f32.xlu0 %v632
      %v634 = vpop.xlane.xlu0 %633
      %v635 = vsel %vm480, %v628, 0.0
      %636 = vadd.xlane.f32.xlu0 %v635
      %v637 = vpop.xlane.xlu0 %636
      %v638 = vrcp.pop %v631
      %v639 = vrcp.pop %v634
      %v640 = vrcp.pop %v637
      %v641 = vmul.f32 %v624, %v638
      %v642 = vmul.f32 %v626, %v639
      %v643 = vmul.f32 %v628, %v640
      %v644 = vpack.c.bf16 %v642, %v641
      %v645 = vpack.c.bf16 %v643, %v643
      %646 = vrot.lane.b32.xlu0 %v565, 56
      %v647 = vpop.permute.xlu0 %646
      %648 = vrot.lane.b32.xlu0 %v566, 56
      %v649 = vpop.permute.xlu0 %648
      %v652 = vsel %vm480, %v644, 0
      %v655 = vsel %vm480, %v645, 0
      %v658 = vsel %vm527, %v649, 0
      %660 = vmatpush.bf16.msra.mxu0 0
      %661 = vmatpush.bf16.msra.mxu0 0
      %662 = vmatpush.bf16.msra.mxu0 0
      %663 = vmatpush.bf16.msra.mxu0 0
      %664 = vmatpush.bf16.msra.mxu0 0
      %665 = vmatpush.bf16.msra.mxu0 0
      %666 = vmatpush.bf16.msra.mxu0 %v658
      %667 = vmatpush.bf16.msra.mxu0 %v647
      %668 = vmatmul.bf16.gmra.mxu0 %v652
      %v669 = vpop.f32.mrf.mxu0
      %v670 = vadd.f32 0.0, %v669
      %v671 = vpop.f32.mrf.mxu0
      %v672 = vadd.f32 0.0, %v671
      %673 = vmatmul.bf16.gmra.mxu0 %v655
      %v674 = vpop.f32.mrf.mxu0
      %v675 = vadd.f32 0.0, %v674
      %v676 = vpop.f32.mrf.mxu0
      %677 = vdwg.mxu0
      %v678 = vpack.c.bf16 %v670, %v670
      %v679 = vpack.c.bf16 %v672, %v672
      %v680 = vpack.c.bf16 %v675, %v675
      %684 = vrot.lane.b32.xlu0 %v678, 8
      %v685 = vpop.permute.xlu0 %684
      %686 = vrot.lane.b32.xlu0 %v679, 8
      %v687 = vpop.permute.xlu0 %686
      %688 = vrot.lane.b32.xlu0 %v680, 8
      %v689 = vpop.permute.xlu0 %688
      %vm693 = vcmask 126016
      %694 = vst.msk [vmem:[#allocation3] sm:$0xf] %vm693, %v685
      %695 = vst.msk [vmem:[#allocation3 + $0x4] sm:$0xf] %vm693, %v687
      %696 = vst.msk [vmem:[#allocation3 + $0x8] sm:$0xf] %vm693, %v689
      %v697 = vld [vmem:[#allocation2] sm:$0xf]
      %v698 = vld [vmem:[#allocation2 + $0x4] sm:$0xf]
      %v699 = vld [vmem:[#allocation2 + $0x8] sm:$0xf]
      %v703 = vunpack.c.l.b16 %v697
      %v704 = vunpack.c.l.b16 %v698
      %v705 = vunpack.c.l.b16 %v699
      %v706 = vpack.c.b16 %v704, %v703
      %v707 = vpack.c.b16 %v705, %v705
      %708 = vrot.lane.b32.xlu0 %v706, 112
      %v709 = vpop.permute.xlu0 %708
      %710 = vrot.lane.b32.xlu0 %v707, 112
      %v711 = vpop.permute.xlu0 %710
      %712 = vrot.lane.b32.xlu0 %v706, 80
      %v713 = vpop.permute.xlu0 %712
      %714 = vrot.lane.b32.xlu0 %v707, 80
      %v715 = vpop.permute.xlu0 %714
      %v717 = vsel %vm443, %v709, 0
      %v720 = vsel %vm443, %v711, 0
      %v723 = vsel %vm443, %v713, 0
      %v726 = vsel %vm443, %v715, 0
      %728 = vmatpush.bf16.xpose.msra.mxu0 0
      %729 = vmatpush.bf16.xpose.msra.mxu0 0
      %730 = vmatpush.bf16.xpose.msra.mxu0 0
      %731 = vmatpush.bf16.xpose.msra.mxu0 0
      %732 = vmatpush.bf16.xpose.msra.mxu0 0
      %733 = vmatpush.bf16.xpose.msra.mxu0 0
      %734 = vmatpush.bf16.xpose.msra.mxu0 %v726
      %735 = vmatpush.bf16.xpose.msra.mxu0 %v723
      %736 = vmatmul.bf16.gmra.mxu0 %v717
      %v737 = vpop.f32.mrf.mxu0
      %v738 = vadd.f32 0.0, %v737
      %v739 = vpop.f32.mrf.mxu0
      %v740 = vadd.f32 0.0, %v739
      %741 = vmatmul.bf16.gmra.mxu0 %v720
      %v742 = vpop.f32.mrf.mxu0
      %v743 = vadd.f32 0.0, %v742
      %v744 = vpop.f32.mrf.mxu0
      %745 = vdwg.mxu0
      %v746 = vmul.f32 %v738, 0.35355338
      %v747 = vmul.f32 %v740, 0.35355338
      %v748 = vmul.f32 %v743, 0.35355338
      %v749 = vadd.f32 %v746, %v427
      %v750 = vadd.f32 %v747, %v427
      %v751 = vadd.f32 %v748, %v427
      %v752 = vsel %vm480, %v749, -inf
      %753 = vmax.xlane.f32.xlu0 %v752
      %v754 = vpop.xlane.xlu0 %753
      %v755 = vsel %vm480, %v750, -inf
      %756 = vmax.xlane.f32.xlu0 %v755
      %v757 = vpop.xlane.xlu0 %756
      %v758 = vsel %vm480, %v751, -inf
      %759 = vmax.xlane.f32.xlu0 %v758
      %v760 = vpop.xlane.xlu0 %759
      %v761 = vsub.f32 %v749, %v754
      %v762 = vsub.f32 %v750, %v757
      %v763 = vsub.f32 %v751, %v760
      %v764 = vmul.f32 %v761, 1.442695
      %v765 = vpow.pop %v764
      %v766 = vmul.f32 %v762, 1.442695
      %v767 = vpow.pop %v766
      %v768 = vmul.f32 %v763, 1.442695
      %v769 = vpow.pop %v768
      %v770 = vsel %vm480, %v765, 0.0
      %771 = vadd.xlane.f32.xlu0 %v770
      %v772 = vpop.xlane.xlu0 %771
      %v773 = vsel %vm480, %v767, 0.0
      %774 = vadd.xlane.f32.xlu0 %v773
      %v775 = vpop.xlane.xlu0 %774
      %v776 = vsel %vm480, %v769, 0.0
      %777 = vadd.xlane.f32.xlu0 %v776
      %v778 = vpop.xlane.xlu0 %777
      %v779 = vrcp.pop %v772
      %v780 = vrcp.pop %v775
      %v781 = vrcp.pop %v778
      %v782 = vmul.f32 %v765, %v779
      %v783 = vmul.f32 %v767, %v780
      %v784 = vmul.f32 %v769, %v781
      %v785 = vpack.c.bf16 %v783, %v782
      %v786 = vpack.c.bf16 %v784, %v784
      %787 = vrot.lane.b32.xlu0 %v706, 48
      %v788 = vpop.permute.xlu0 %787
      %789 = vrot.lane.b32.xlu0 %v707, 48
      %v790 = vpop.permute.xlu0 %789
      %v793 = vsel %vm480, %v785, 0
      %v796 = vsel %vm480, %v786, 0
      %v799 = vsel %vm527, %v790, 0
      %801 = vmatpush.bf16.msra.mxu0 0
      %802 = vmatpush.bf16.msra.mxu0 0
      %803 = vmatpush.bf16.msra.mxu0 0
      %804 = vmatpush.bf16.msra.mxu0 0
      %805 = vmatpush.bf16.msra.mxu0 0
      %806 = vmatpush.bf16.msra.mxu0 0
      %807 = vmatpush.bf16.msra.mxu0 %v799
      %808 = vmatpush.bf16.msra.mxu0 %v788
      %809 = vmatmul.bf16.gmra.mxu0 %v793
      %v810 = vpop.f32.mrf.mxu0
      %v811 = vadd.f32 0.0, %v810
      %v812 = vpop.f32.mrf.mxu0
      %v813 = vadd.f32 0.0, %v812
      %814 = vmatmul.bf16.gmra.mxu0 %v796
      %v815 = vpop.f32.mrf.mxu0
      %v816 = vadd.f32 0.0, %v815
      %v817 = vpop.f32.mrf.mxu0
      %818 = vdwg.mxu0
      %v819 = vpack.c.bf16 %v811, %v811
      %v820 = vpack.c.bf16 %v813, %v813
      %v821 = vpack.c.bf16 %v816, %v816
      %825 = vrot.lane.b32.xlu0 %v819, 16
      %v826 = vpop.permute.xlu0 %825
      %827 = vrot.lane.b32.xlu0 %v820, 16
      %v828 = vpop.permute.xlu0 %827
      %829 = vrot.lane.b32.xlu0 %v821, 16
      %v830 = vpop.permute.xlu0 %829
      %vm834 = vcmask 191616
      %835 = vst.msk [vmem:[#allocation3] sm:$0xf] %vm834, %v826
      %836 = vst.msk [vmem:[#allocation3 + $0x4] sm:$0xf] %vm834, %v828
      %837 = vst.msk [vmem:[#allocation3 + $0x8] sm:$0xf] %vm834, %v830
      %v838 = vld [vmem:[#allocation2] sm:$0xf]
      %v839 = vld [vmem:[#allocation2 + $0x4] sm:$0xf]
      %v840 = vld [vmem:[#allocation2 + $0x8] sm:$0xf]
      %v844 = vunpack.c.l.b16 %v838
      %v845 = vunpack.c.l.b16 %v839
      %v846 = vunpack.c.l.b16 %v840
      %v847 = vpack.c.b16 %v845, %v844
      %v848 = vpack.c.b16 %v846, %v846
      %849 = vrot.lane.b32.xlu0 %v847, 104
      %v850 = vpop.permute.xlu0 %849
      %851 = vrot.lane.b32.xlu0 %v848, 104
      %v852 = vpop.permute.xlu0 %851
      %853 = vrot.lane.b32.xlu0 %v847, 72
      %v854 = vpop.permute.xlu0 %853
      %855 = vrot.lane.b32.xlu0 %v848, 72
      %v856 = vpop.permute.xlu0 %855
      %v858 = vsel %vm443, %v850, 0
      %v861 = vsel %vm443, %v852, 0
      %v864 = vsel %vm443, %v854, 0
      %v867 = vsel %vm443, %v856, 0
      %869 = vmatpush.bf16.xpose.msra.mxu0 0
      %870 = vmatpush.bf16.xpose.msra.mxu0 0
      %871 = vmatpush.bf16.xpose.msra.mxu0 0
      %872 = vmatpush.bf16.xpose.msra.mxu0 0
      %873 = vmatpush.bf16.xpose.msra.mxu0 0
      %874 = vmatpush.bf16.xpose.msra.mxu0 0
      %875 = vmatpush.bf16.xpose.msra.mxu0 %v867
      %876 = vmatpush.bf16.xpose.msra.mxu0 %v864
      %877 = vmatmul.bf16.gmra.mxu0 %v858
      %v878 = vpop.f32.mrf.mxu0
      %v879 = vadd.f32 0.0, %v878
      %v880 = vpop.f32.mrf.mxu0
      %v881 = vadd.f32 0.0, %v880
      %882 = vmatmul.bf16.gmra.mxu0 %v861
      %v883 = vpop.f32.mrf.mxu0
      %v884 = vadd.f32 0.0, %v883
      %v885 = vpop.f32.mrf.mxu0
      %886 = vdwg.mxu0
      %v887 = vmul.f32 %v879, 0.35355338
      %v888 = vmul.f32 %v881, 0.35355338
      %v889 = vmul.f32 %v884, 0.35355338
      %v890 = vadd.f32 %v887, %v427
      %v891 = vadd.f32 %v888, %v427
      %v892 = vadd.f32 %v889, %v427
      %v893 = vsel %vm480, %v890, -inf
      %894 = vmax.xlane.f32.xlu0 %v893
      %v895 = vpop.xlane.xlu0 %894
      %v896 = vsel %vm480, %v891, -inf
      %897 = vmax.xlane.f32.xlu0 %v896
      %v898 = vpop.xlane.xlu0 %897
      %v899 = vsel %vm480, %v892, -inf
      %900 = vmax.xlane.f32.xlu0 %v899
      %v901 = vpop.xlane.xlu0 %900
      %v902 = vsub.f32 %v890, %v895
      %v903 = vsub.f32 %v891, %v898
      %v904 = vsub.f32 %v892, %v901
      %v905 = vmul.f32 %v902, 1.442695
      %v906 = vpow.pop %v905
      %v907 = vmul.f32 %v903, 1.442695
      %v908 = vpow.pop %v907
      %v909 = vmul.f32 %v904, 1.442695
      %v910 = vpow.pop %v909
      %v911 = vsel %vm480, %v906, 0.0
      %912 = vadd.xlane.f32.xlu0 %v911
      %v913 = vpop.xlane.xlu0 %912
      %v914 = vsel %vm480, %v908, 0.0
      %915 = vadd.xlane.f32.xlu0 %v914
      %v916 = vpop.xlane.xlu0 %915
      %v917 = vsel %vm480, %v910, 0.0
      %918 = vadd.xlane.f32.xlu0 %v917
      %v919 = vpop.xlane.xlu0 %918
      %v920 = vrcp.pop %v913
      %v921 = vrcp.pop %v916
      %v922 = vrcp.pop %v919
      %v923 = vmul.f32 %v906, %v920
      %v924 = vmul.f32 %v908, %v921
      %v925 = vmul.f32 %v910, %v922
      %v926 = vpack.c.bf16 %v924, %v923
      %v927 = vpack.c.bf16 %v925, %v925
      %928 = vrot.lane.b32.xlu0 %v847, 40
      %v929 = vpop.permute.xlu0 %928
      %930 = vrot.lane.b32.xlu0 %v848, 40
      %v931 = vpop.permute.xlu0 %930
      %v934 = vsel %vm480, %v926, 0
      %v937 = vsel %vm480, %v927, 0
      %v940 = vsel %vm527, %v931, 0
      %942 = vmatpush.bf16.msra.mxu0 0
      %943 = vmatpush.bf16.msra.mxu0 0
      %944 = vmatpush.bf16.msra.mxu0 0
      %945 = vmatpush.bf16.msra.mxu0 0
      %946 = vmatpush.bf16.msra.mxu0 0
      %947 = vmatpush.bf16.msra.mxu0 0
      %948 = vmatpush.bf16.msra.mxu0 %v940
      %949 = vmatpush.bf16.msra.mxu0 %v929
      %950 = vmatmul.bf16.gmra.mxu0 %v934
      %v951 = vpop.f32.mrf.mxu0
      %v952 = vadd.f32 0.0, %v951
      %v953 = vpop.f32.mrf.mxu0
      %v954 = vadd.f32 0.0, %v953
      %955 = vmatmul.bf16.gmra.mxu0 %v937
      %v956 = vpop.f32.mrf.mxu0
      %v957 = vadd.f32 0.0, %v956
      %v958 = vpop.f32.mrf.mxu0
      %959 = vdwg.mxu0
      %v960 = vpack.c.bf16 %v952, %v952
      %v961 = vpack.c.bf16 %v954, %v954
      %v962 = vpack.c.bf16 %v957, %v957
      %966 = vrot.lane.b32.xlu0 %v960, 24
      %v967 = vpop.permute.xlu0 %966
      %968 = vrot.lane.b32.xlu0 %v961, 24
      %v969 = vpop.permute.xlu0 %968
      %970 = vrot.lane.b32.xlu0 %v962, 24
      %v971 = vpop.permute.xlu0 %970
      %vm975 = vcmask 257216
      %976 = vst.msk [vmem:[#allocation3] sm:$0xf] %vm975, %v967
      %977 = vst.msk [vmem:[#allocation3 + $0x4] sm:$0xf] %vm975, %v969
      %978 = vst.msk [vmem:[#allocation3 + $0x8] sm:$0xf] %vm975, %v971
      %v979 = vld [vmem:[#allocation3] sm:$0xf]
      %v980 = vld [vmem:[#allocation3 + $0x4] sm:$0xf]
      %v981 = vld [vmem:[#allocation3 + $0x8] sm:$0xf]
      %v982 = vld [vmem:[%s5] sm:$0xf]
      %v983 = vld [vmem:[%s5 + $0x4] sm:$0xf]
      %v984 = vld [vmem:[%s5 + $0x8] sm:$0xf]
      %v985 = vld [vmem:[%s5 + $0xc] sm:$0xf]
      %v986 = vld [vmem:[%s6] sm:$0x1]
      %v988 = vperm.slane %v986, 0
      %v993 = vunpack.c.l.b16 %v979
      %v994 = vunpack.c.l.b16 %v980
      %v995 = vunpack.c.l.b16 %v981
      %v996 = vpack.c.b16 %v994, %v993
      %v997 = vpack.c.b16 %v995, %v995
      %v1002 = vunpack.c.l.b16 %v982
      %v1003 = vunpack.c.l.b16 %v983
      %v1004 = vunpack.c.l.b16 %v984
      %v1005 = vunpack.c.l.b16 %v985
      %v1006 = vpack.c.b16 %v1003, %v1002
      %v1007 = vpack.c.b16 %v1005, %v1004
      %v1011 = vsel %vm283, %v996, 0
      %v1014 = vsel %vm283, %v997, 0
      %1016 = vmatpush.bf16.msra.mxu0 0
      %1017 = vmatpush.bf16.msra.mxu0 0
      %1018 = vmatpush.bf16.msra.mxu0 0
      %1019 = vmatpush.bf16.msra.mxu0 0
      %1020 = vmatpush.bf16.msra.mxu0 0
      %1021 = vmatpush.bf16.msra.mxu0 0
      %1022 = vmatpush.bf16.msra.mxu0 %v1007
      %1023 = vmatpush.bf16.msra.mxu0 %v1006
      %1024 = vmatmul.bf16.gmra.mxu0 %v1011
      %v1025 = vpop.f32.mrf.mxu0
      %v1026 = vadd.f32 %v988, %v1025
      %v1027 = vpop.f32.mrf.mxu0
      %v1028 = vadd.f32 %v988, %v1027
      %1029 = vmatmul.bf16.gmra.mxu0 %v1014
      %v1030 = vpop.f32.mrf.mxu0
      %v1031 = vadd.f32 %v988, %v1030
      %v1032 = vpop.f32.mrf.mxu0
      %1033 = vdwg.mxu0
      %v1034 = vadd.f32 %v1026, %v280
      %v1035 = vadd.f32 %v1028, %v281
      %v1036 = vadd.f32 %v1031, %v282
      %1037 = vst.msk [vmem:[%s278] sm:$0xff] %vm283, %v1034
      %1038 = vst.msk [vmem:[%s278 + $0x8] sm:$0xff] %vm283, %v1035
      %1039 = vst.msk [vmem:[%s278 + $0x10] sm:$0xff] %vm283, %v1036
      %p1040 = scmp.lt.s32.totalorder %s18, 1
      %s1041 = scalar_select %p1040, %s18, 1
      %s1042 = smul.addr %s1041, 3
      %s1043 = smul.addr %s1042, 8
      %s1044 = scalar_lea.vmem %s7, %s1043
      // Predicated region
      $region49: #{vit_classification_forward.7} parent=47 // pred_check
        %p1045 = pneg %p188
      $region50: #{vit_classification_forward.7} parent=47 // pred_check_branch
        %1047 = sbr.rel (%p1045) target = $region52
      $region51: #{vit_classification_forward.7} parent=47 // pred_region
        _
      $region52: #{vit_classification_forward.7} parent=47 // pred_fallthru
        _
    $region48: #{vit_classification_forward.7} parent=5 // pred_fallthru
      _
    %p1048 = scmp.le.s32.totalorder 2, %s13
    // Predicated region
    $region53: #{vit_classification_forward.7} parent=5 // pred_check
      %p1049 = pneg %p1048
    $region54: #{vit_classification_forward.7} parent=5 // pred_check_branch
      %1051 = sbr.rel (%p1049) target = $region56
    $region55: #{vit_classification_forward.7} parent=5 // pred_region
      %s1052 = ssub.s32 %s13, 2
      // Predicated region
      $region57: #{vit_classification_forward.7} parent=55 // pred_check
        %p1053 = pneg %p194
      $region58: #{vit_classification_forward.7} parent=55 // pred_check_branch
        %1055 = sbr.rel (%p1053) target = $region60
      $region59: #{vit_classification_forward.7} parent=55 // pred_region
        %p1056 = scmp.lt.s32.totalorder %s19, 1
        %s1057 = scalar_select %p1056, %s19, 1
        %s1058 = smul.addr %s1057, 3
        %s1059 = smul.addr %s1058, 8
        %s1060 = scalar_lea.vmem %s7, %s1059
      $region60: #{vit_classification_forward.7} parent=55 // pred_fallthru
        _
    $region56: #{vit_classification_forward.7} parent=5 // pred_fallthru
      _
  $region6: #{vit_classification_forward.7} parent=0 // loop_footer
    %s17 = sadd.s32 1, %s13
  $region7: #{vit_classification_forward.7} parent=0 // loop_footer_branch
    %12 = sbr.rel target = $region3
  $region8: #{vit_classification_forward.7} parent=0 // loop_exit
    _

</llo_original>
